<compile_context>
chip_gen: v7x
topology: tpu7x:2x2x1
jax: 0.10.0
libtpu: 0.0.40
codegen_flags: <defaults>
</compile_context>

<pallas_src>
import functools

import jax
import jax.numpy as jnp
from jax.experimental import pallas as pl
from jax.experimental.pallas import tpu as pltpu


_ACT_DTYPE = jnp.bfloat16            # inter-kernel activation dtype

# Default matmul tile sizes (multiples of 256 for v6e/v7x MXU width; shrunk
# automatically to the full dim for small problems like the demo shapes).
_TM, _TN, _TK, _TI = 256, 512, 512, 512


def _round_up(x, m):
    return ((x + m - 1) // m) * m


def _scoped_vmem_limit():
    """Generation-gated scoped VMEM: phys/2, clamped to [32 MiB, 96 MiB]."""
    try:
        info = pltpu.get_tpu_info()
        phys = int(getattr(info, "vmem_capacity_bytes", 0) or 0)
    except Exception:
        phys = 0
    if phys <= 0:
        phys = 64 * 1024 * 1024          # conservative (v7x physical)
    return max(32 * 1024 * 1024, min(96 * 1024 * 1024, phys // 2))


_VMEM_LIMIT = _scoped_vmem_limit()


def _pick_tile(dim, desired, align):
    """Largest tile <= desired that divides dim (multiple of align), else dim.

    Callers must pre-pad any large dimension that has no aligned divisor
    (done at init for the vocab/decoder axis) so the full-dim fallback only
    triggers for small dims where a single block is fine.
    """
    if dim <= desired:
        return dim
    t = (desired // align) * align
    while t >= align:
        if dim % t == 0:
            return t
        t -= align
    return dim


# ----------------------------- Pallas kernels -------------------------------

def _gelu(x):
    # tanh approximation of GELU ("gelu_new"); PyTorch BERT default is erf-GELU,
    # divergence ~1e-3 — weights here are synthetic anyway.  f32 math so the
    # VPU/EUP path is valid on v5e (no bf16 VALU/EUP there).
    return 0.5 * x * (1.0 + jnp.tanh(0.7978845608028654 * (x + 0.044715 * x * x * x)))


def _dense_kernel(x_ref, w_ref, b_ref, o_ref, acc_ref, *, activation):
    k = pl.program_id(2)

    @pl.when(k == 0)
    def _():
        acc_ref[...] = jnp.zeros_like(acc_ref)

    # bf16 operands into the MXU, f32 accumulation.
    acc_ref[...] += jnp.dot(x_ref[...].astype(jnp.bfloat16),
                            w_ref[...].astype(jnp.bfloat16),
                            preferred_element_type=jnp.float32)

    @pl.when(k == pl.num_programs(2) - 1)
    def _():
        y = acc_ref[...] + b_ref[...].astype(jnp.float32)
        if activation == "gelu":
            y = _gelu(y)
        o_ref[...] = y.astype(o_ref.dtype)


def dense(x, w, b, activation=None, out_dtype=_ACT_DTYPE):
    """y = act(x @ w + b).  x:[M,K], w:[K,N] bf16, b:[N] f32 -> [M,N] out_dtype."""
    M, K = x.shape
    N = w.shape[1]
    tm = _pick_tile(M, _TM, 8)
    tn = _pick_tile(N, _TN, 128)
    tk = _pick_tile(K, _TK, 128)
    grid = (M // tm, N // tn, K // tk)
    # TODO(synk): pl.Buffered(3) on the weight spec for the vocab matmul (few K
    # steps per output tile) once deeper buffering is verified on all gens.
    return pl.pallas_call(
        functools.partial(_dense_kernel, activation=activation),
        out_shape=jax.ShapeDtypeStruct((M, N), out_dtype),
        grid=grid,
        in_specs=[
            pl.BlockSpec((tm, tk), lambda i, j, k: (i, k)),
            pl.BlockSpec((tk, tn), lambda i, j, k: (k, j)),
            pl.BlockSpec((1, tn), lambda i, j, k: (0, j)),
        ],
        out_specs=pl.BlockSpec((tm, tn), lambda i, j, k: (i, j)),
        scratch_shapes=[pltpu.VMEM((tm, tn), jnp.float32)],
        compiler_params=pltpu.CompilerParams(
            dimension_semantics=("parallel", "parallel", "arbitrary"),
            vmem_limit_bytes=_VMEM_LIMIT),
        cost_estimate=pl.CostEstimate(
            flops=2 * M * N * K,
            transcendentals=(M * N if activation == "gelu" else 0),
            bytes_accessed=M * K * 2 + K * N * 2 + M * N * 2 + N * 4),
    )(x, w, b.reshape(1, N))


def _dense_ln_kernel(*refs, activation, has_residual):
    if has_residual:
        x_ref, w_ref, b_ref, res_ref, g_ref, beta_ref, o_ref, acc_ref = refs
    else:
        x_ref, w_ref, b_ref, g_ref, beta_ref, o_ref, acc_ref = refs
        res_ref = None

    k = pl.program_id(1)

    @pl.when(k == 0)
    def _():
        acc_ref[...] = jnp.zeros_like(acc_ref)

    acc_ref[...] += jnp.dot(x_ref[...].astype(jnp.bfloat16),
                            w_ref[...].astype(jnp.bfloat16),
                            preferred_element_type=jnp.float32)

    @pl.when(k == pl.num_programs(1) - 1)
    def _():
        y = acc_ref[...] + b_ref[...].astype(jnp.float32)
        if activation == "gelu":
            y = _gelu(y)
        if has_residual:
            y = y + res_ref[...].astype(jnp.float32)
        mu = jnp.mean(y, axis=-1, keepdims=True)
        var = jnp.mean(jnp.square(y - mu), axis=-1, keepdims=True)
        yn = (y - mu) * jax.lax.rsqrt(var + 1e-12)
        o_ref[...] = (yn * g_ref[...].astype(jnp.float32)
                      + beta_ref[...].astype(jnp.float32)).astype(o_ref.dtype)


def dense_add_ln(x, w, b, gamma, beta, residual=None, activation=None):
    """LayerNorm(act(x @ w + b) [+ residual]) fused in the matmul epilogue.

    N (the LN axis) is kept un-tiled in one block; grid is (M, K) with K as the
    innermost reduction axis and a f32 VMEM accumulator.
    """
    M, K = x.shape
    N = w.shape[1]
    tm = _pick_tile(M, _TM, 8)
    tk = _pick_tile(K, _TK, 128)
    grid = (M // tm, K // tk)

    in_specs = [
        pl.BlockSpec((tm, tk), lambda i, k: (i, k)),
        pl.BlockSpec((tk, N), lambda i, k: (k, 0)),
        pl.BlockSpec((1, N), lambda i, k: (0, 0)),
    ]
    args = [x, w, b.reshape(1, N)]
    if residual is not None:
        in_specs.append(pl.BlockSpec((tm, N), lambda i, k: (i, 0)))
        args.append(residual)
    in_specs += [pl.BlockSpec((1, N), lambda i, k: (0, 0))] * 2
    args += [gamma.reshape(1, N), beta.reshape(1, N)]

    return pl.pallas_call(
        functools.partial(_dense_ln_kernel, activation=activation,
                          has_residual=residual is not None),
        out_shape=jax.ShapeDtypeStruct((M, N), _ACT_DTYPE),
        grid=grid,
        in_specs=in_specs,
        out_specs=pl.BlockSpec((tm, N), lambda i, k: (i, 0)),
        scratch_shapes=[pltpu.VMEM((tm, N), jnp.float32)],
        compiler_params=pltpu.CompilerParams(
            dimension_semantics=("parallel", "arbitrary"),
            vmem_limit_bytes=_VMEM_LIMIT),
        cost_estimate=pl.CostEstimate(
            flops=2 * M * N * K + 10 * M * N,
            transcendentals=(M * N if activation == "gelu" else 0),
            bytes_accessed=M * K * 2 + K * N * 2 + 2 * M * N * 2),
    )(*args)


def _ffn_kernel(x_ref, wi_ref, bi_ref, wo_ref, bo_ref, g_ref, beta_ref,
                o_ref, acc_ref):
    """Fused FFN: LN(x + gelu(x @ Wi + bi) @ Wo + bo).

    Grid axis 1 tiles the intermediate dim I; the GELU intermediate lives only
    in vregs/VMEM (never written to HBM) and is accumulated into acc_ref.
    """
    j = pl.program_id(1)

    @pl.when(j == 0)
    def _():
        acc_ref[...] = jnp.zeros_like(acc_ref)

    x = x_ref[...].astype(jnp.bfloat16)                              # [tm, H]
    inter = jnp.dot(x, wi_ref[...].astype(jnp.bfloat16),
                    preferred_element_type=jnp.float32)
    inter = _gelu(inter + bi_ref[...].astype(jnp.float32))           # [tm, ti]
    acc_ref[...] += jnp.dot(inter.astype(jnp.bfloat16),
                            wo_ref[...].astype(jnp.bfloat16),
                            preferred_element_type=jnp.float32)

    @pl.when(j == pl.num_programs(1) - 1)
    def _():
        y = (acc_ref[...] + bo_ref[...].astype(jnp.float32)
             + x_ref[...].astype(jnp.float32))                       # residual
        mu = jnp.mean(y, axis=-1, keepdims=True)
        var = jnp.mean(jnp.square(y - mu), axis=-1, keepdims=True)
        yn = (y - mu) * jax.lax.rsqrt(var + 1e-12)
        o_ref[...] = (yn * g_ref[...].astype(jnp.float32)
                      + beta_ref[...].astype(jnp.float32)).astype(o_ref.dtype)


def ffn_fused(x, wi, bi, wo, bo, gamma, beta):
    """LayerNorm(x + GELU(x @ wi + bi) @ wo + bo); the [M, I] intermediate
    never round-trips to HBM."""
    M, H = x.shape
    I = wi.shape[1]
    tm = _pick_tile(M, _TM, 8)
    ti = _pick_tile(I, _TI, 128)
    grid = (M // tm, I // ti)
    return pl.pallas_call(
        _ffn_kernel,
        out_shape=jax.ShapeDtypeStruct((M, H), _ACT_DTYPE),
        grid=grid,
        in_specs=[
            pl.BlockSpec((tm, H), lambda i, j: (i, 0)),
            pl.BlockSpec((H, ti), lambda i, j: (0, j)),
            pl.BlockSpec((1, ti), lambda i, j: (0, j)),
            pl.BlockSpec((ti, H), lambda i, j: (j, 0)),
            pl.BlockSpec((1, H), lambda i, j: (0, 0)),
            pl.BlockSpec((1, H), lambda i, j: (0, 0)),
            pl.BlockSpec((1, H), lambda i, j: (0, 0)),
        ],
        out_specs=pl.BlockSpec((tm, H), lambda i, j: (i, 0)),
        scratch_shapes=[pltpu.VMEM((tm, H), jnp.float32)],
        compiler_params=pltpu.CompilerParams(
            dimension_semantics=("parallel", "arbitrary"),
            vmem_limit_bytes=_VMEM_LIMIT),
        cost_estimate=pl.CostEstimate(
            flops=4 * M * I * H + 10 * M * H,
            transcendentals=M * I,
            bytes_accessed=2 * M * H * 2 + 2 * H * I * 2 + M * H * 2),
    )(x, wi, bi.reshape(1, I), wo, bo.reshape(1, H),
      gamma.reshape(1, H), beta.reshape(1, H))


def _ln_kernel(x_ref, g_ref, b_ref, o_ref):
    x = x_ref[...].astype(jnp.float32)
    mu = jnp.mean(x, axis=-1, keepdims=True)
    var = jnp.mean(jnp.square(x - mu), axis=-1, keepdims=True)
    y = (x - mu) * jax.lax.rsqrt(var + 1e-12)
    o_ref[...] = (y * g_ref[...] + b_ref[...]).astype(o_ref.dtype)


def layernorm(x, gamma, beta):
    """LayerNorm(x) with eps=1e-12 (no zero-residual DMA); bf16 output."""
    M, H = x.shape
    tm = _pick_tile(M, 512, 8)
    return pl.pallas_call(
        _ln_kernel,
        out_shape=jax.ShapeDtypeStruct((M, H), _ACT_DTYPE),
        grid=(M // tm,),
        in_specs=[pl.BlockSpec((tm, H), lambda i: (i, 0)),
                  pl.BlockSpec((1, H), lambda i: (0, 0)),
                  pl.BlockSpec((1, H), lambda i: (0, 0))],
        out_specs=pl.BlockSpec((tm, H), lambda i: (i, 0)),
        compiler_params=pltpu.CompilerParams(
            dimension_semantics=("parallel",),
            vmem_limit_bytes=_VMEM_LIMIT),
    )(x, gamma.reshape(1, H), beta.reshape(1, H))


def _attn_kernel(qkv_ref, bias_ref, o_ref, *, scale):
    # qkv_ref block: [3, 1, 1, S, Dh] bf16 (full last-two dims -> unmasked
    # loads); one (batch, head) pair per grid step, output written directly.
    q = (qkv_ref[0, 0, 0].astype(jnp.float32) * scale).astype(jnp.bfloat16)
    k = qkv_ref[1, 0, 0]
    v = qkv_ref[2, 0, 0]
    bias = bias_ref[0]                               # [1, S] additive mask
    dn = (((1,), (1,)), ((), ()))                    # contract last dims (no k.T)
    s = jax.lax.dot_general(q, k, dn, preferred_element_type=jnp.float32) + bias
    s = s - jnp.max(s, axis=-1, keepdims=True)
    p = jnp.exp(s)                                   # softmax math stays f32
    p = p * pl.reciprocal(jnp.sum(p, axis=-1, keepdims=True), approx=True)
    o_ref[0, 0] = jnp.dot(p.astype(jnp.bfloat16), v,
                          preferred_element_type=jnp.float32).astype(o_ref.dtype)


def attention(qkv5, attn_bias, scale):
    """qkv5: [3, B, nH, S, Dh] bf16; attn_bias: [B, 1, S] f32 -> [B, nH, S, Dh].

    grid=(B, nH) both "parallel": only one head's working set resident (bounds
    VMEM for long S) and enough parallel extent to keep both v7x TCs busy.
    """
    _, B, nH, S, Dh = qkv5.shape
    # TODO(synk): flash-style KV-tiled online softmax for very long sequences;
    # this kernel still materializes a full [S, S] score matrix per head.
    return pl.pallas_call(
        functools.partial(_attn_kernel, scale=scale),
        out_shape=jax.ShapeDtypeStruct((B, nH, S, Dh), _ACT_DTYPE),
        grid=(B, nH),
        in_specs=[pl.BlockSpec((3, 1, 1, S, Dh), lambda b, h: (0, b, h, 0, 0)),
                  pl.BlockSpec((1, 1, S), lambda b, h: (b, 0, 0))],
        out_specs=pl.BlockSpec((1, 1, S, Dh), lambda b, h: (b, h, 0, 0)),
        compiler_params=pltpu.CompilerParams(
            dimension_semantics=("parallel", "parallel"),
            vmem_limit_bytes=_VMEM_LIMIT),
        cost_estimate=pl.CostEstimate(
            flops=4 * B * nH * S * S * Dh,
            transcendentals=B * nH * S * S,
            bytes_accessed=4 * B * nH * S * Dh * 2 + B * S * 4),
    )(qkv5, attn_bias)


# ------------------------------ parameters ----------------------------------

def init_params(key, cfg):
    H, V, I, L = cfg["hidden"], cfg["vocab"], cfg["intermediate"], cfg["layers"]
    V_pad = _round_up(V, 256)      # lane/MXU-aligned decoder N; sliced off later

    def nrm(k, shape):
        return 0.02 * jax.random.normal(k, shape, jnp.float32)

    def w16(k, shape):                          # matmul weights stored bf16
        return nrm(k, shape).astype(jnp.bfloat16)

    keys = jax.random.split(key, 4 + L)
    p = {
        "word_emb": nrm(keys[0], (V, H)),
        "pos_emb": nrm(keys[1], (cfg["max_pos"], H)),
        "type_emb": nrm(keys[2], (2, H)),
        "emb_ln_g": jnp.ones((H,), jnp.float32),
        "emb_ln_b": jnp.zeros((H,), jnp.float32),
    }
    layers = []
    for li in range(L):
        lk = jax.random.split(keys[3 + li], 6)
        layers.append(dict(
            qkv_w=jnp.concatenate(
                [nrm(lk[0], (H, H)), nrm(lk[1], (H, H)), nrm(lk[2], (H, H))],
                axis=1).astype(jnp.bfloat16),                  # fused Q|K|V
            qkv_b=jnp.zeros((3 * H,), jnp.float32),
            o_w=w16(lk[3], (H, H)), o_b=jnp.zeros((H,), jnp.float32),
            ln1_g=jnp.ones((H,), jnp.float32), ln1_b=jnp.zeros((H,), jnp.float32),
            i_w=w16(lk[4], (H, I)), i_b=jnp.zeros((I,), jnp.float32),
            f_w=w16(lk[5], (I, H)), f_b=jnp.zeros((H,), jnp.float32),
            ln2_g=jnp.ones((H,), jnp.float32), ln2_b=jnp.zeros((H,), jnp.float32),
        ))
    p["layers"] = layers
    p["mlm_dense_w"] = w16(keys[3 + L], (H, H))
    p["mlm_dense_b"] = jnp.zeros((H,), jnp.float32)
    p["mlm_ln_g"] = jnp.ones((H,), jnp.float32)
    p["mlm_ln_b"] = jnp.zeros((H,), jnp.float32)
    # Decoder tied to word embeddings, zero-padded on the vocab axis so the
    # biggest matmul always has an aligned N tile.
    dec_w = jnp.zeros((H, V_pad), jnp.bfloat16)
    dec_w = dec_w.at[:, :V].set(p["word_emb"].T.astype(jnp.bfloat16))
    p["decoder_w"] = dec_w
    p["decoder_b"] = jnp.zeros((V_pad,), jnp.float32)
    return p


# ------------------------------- losses (glue) -------------------------------

def _ce_ignore(logits, labels, ignore_index=-100):
    """torch.nn.CrossEntropyLoss(ignore_index=-100, reduction='mean')."""
    logp = jax.nn.log_softmax(logits, axis=-1)
    valid = labels != ignore_index
    safe = jnp.where(valid, labels, 0)
    nll = -jnp.take_along_axis(logp, safe[:, None], axis=-1)[:, 0]
    denom = jnp.maximum(jnp.sum(valid), 1)
    return jnp.sum(jnp.where(valid, nll, 0.0)) / denom


def _ce_mean(logits, labels):
    logp = jax.nn.log_softmax(logits, axis=-1)
    return jnp.mean(-jnp.take_along_axis(logp, labels[:, None], axis=-1)[:, 0])


# ------------------------------- forward ------------------------------------

def unimc_forward(params, cfg, input_ids, attention_mask, token_type_ids,
                  position_ids=None, mlmlabels=None, clslabels=None,
                  clslabels_mask=None, mlmlabels_mask=None, yes_token=0):
    B, S = input_ids.shape
    H = cfg["hidden"]
    V = cfg["vocab"]
    nH = cfg["heads"]
    Dh = H // nH
    scale = 1.0 / float(Dh) ** 0.5

    if position_ids is None:
        position_ids = jnp.broadcast_to(jnp.arange(S), (B, S))

    # Embedding gathers are plain-JAX glue; LayerNorm is a Pallas kernel.
    emb = (params["word_emb"][input_ids]
           + params["pos_emb"][position_ids]
           + params["type_emb"][token_type_ids]).reshape(B * S, H).astype(jnp.float32)
    h = layernorm(emb, params["emb_ln_g"], params["emb_ln_b"])      # bf16

    # BERT extended attention mask: additive large-negative bias, [B, 1, S].
    attn_bias = ((1.0 - attention_mask.astype(jnp.float32)) * -1e9)[:, None, :]

    for lp in params["layers"]:
        qkv = dense(h, lp["qkv_w"], lp["qkv_b"])                     # [B*S,3H] bf16
        # Head split/merge transposes are plain-JAX glue (bf16, so half-size).
        qkv5 = qkv.reshape(B, S, 3, nH, Dh).transpose(2, 0, 3, 1, 4)  # [3,B,nH,S,Dh]
        ctx = attention(qkv5, attn_bias, scale)                      # [B,nH,S,Dh]
        ctx2d = ctx.transpose(0, 2, 1, 3).reshape(B * S, H)
        h = dense_add_ln(ctx2d, lp["o_w"], lp["o_b"],
                         lp["ln1_g"], lp["ln1_b"], residual=h)       # o-proj+add+LN1
        h = ffn_fused(h, lp["i_w"], lp["i_b"], lp["f_w"], lp["f_b"],
                      lp["ln2_g"], lp["ln2_b"])                      # fused FFN+LN2

    # MLM head: dense + gelu + LayerNorm (fused), then decode to (padded) vocab.
    t = dense_add_ln(h, params["mlm_dense_w"], params["mlm_dense_b"],
                     params["mlm_ln_g"], params["mlm_ln_b"], activation="gelu")
    logits_pad = dense(t, params["decoder_w"], params["decoder_b"],
                       out_dtype=jnp.float32)                        # [B*S, V_pad]
    logits2d = logits_pad[:, :V]                                     # drop padding
    mlm_logits = logits2d.reshape(B, S, V)

    # UniMC classification head: score of the "yes" token per position + mask.
    cls_logits = mlm_logits[:, :, yes_token].reshape(-1, S) + clslabels_mask

    if mlmlabels is None:
        return 0.0, mlm_logits, cls_logits

    mask_loss = _ce_ignore(logits2d, mlmlabels.reshape(-1))
    cls_loss = _ce_mean(cls_logits, clslabels)
    all_loss = mask_loss + cls_loss
    return all_loss, mlm_logits, cls_logits


# --------------------------------- main --------------------------------------

if __name__ == "__main__":
    cfg = dict(vocab=128, hidden=32, intermediate=64, layers=2, heads=2, max_pos=64)
    yes_token = 5
    B, S = 2, 8

    key = jax.random.PRNGKey(0)
    pkey, ikey, lkey = jax.random.split(key, 3)

    params = init_params(pkey, cfg)

    input_ids = jax.random.randint(ikey, (B, S), 0, cfg["vocab"], dtype=jnp.int32)
    attention_mask = jnp.ones((B, S), jnp.int32)
    token_type_ids = jnp.zeros((B, S), jnp.int32)

    rand_labels = jax.random.randint(lkey, (B, S), 0, cfg["vocab"], dtype=jnp.int32)
    mlm_positions = jnp.broadcast_to((jnp.arange(S) % 4 == 0)[None, :], (B, S))
    mlmlabels = jnp.where(mlm_positions, rand_labels, -100)

    clslabels = jnp.array([1, 3], jnp.int32)                       # label-token positions
    cand = (jnp.arange(S) >= 1) & (jnp.arange(S) <= 3)             # candidate positions
    clslabels_mask = jnp.broadcast_to(
        jnp.where(cand, 0.0, -10000.0)[None, :], (B, S)).astype(jnp.float32)

    @jax.jit
    def run(params, input_ids, attention_mask, token_type_ids,
            mlmlabels, clslabels, clslabels_mask):
        return unimc_forward(params, cfg, input_ids, attention_mask,
                             token_type_ids, position_ids=None,
                             mlmlabels=mlmlabels, clslabels=clslabels,
                             clslabels_mask=clslabels_mask, yes_token=yes_token)

    all_loss, mlm_logits, cls_logits = run(
        params, input_ids, attention_mask, token_type_ids,
        mlmlabels, clslabels, clslabels_mask)

    jax.block_until_ready((all_loss, mlm_logits, cls_logits))

    assert mlm_logits.shape == (B, S, cfg["vocab"])
    assert cls_logits.shape == (B, S)
    assert bool(jnp.isfinite(all_loss))
    print("KERNEL_OK")
</pallas_src>

<mosaic_0001>
module attributes {stable_mosaic.version = 11 : i64} {
  func.func @_ln_kernel(%arg0: i32, %arg1: memref<16x32xf32, #tpu.memory_space<vmem>>, %arg2: memref<1x32xf32, #tpu.memory_space<vmem>>, %arg3: memref<1x32xf32, #tpu.memory_space<vmem>>, %arg4: memref<16x32xbf16, #tpu.memory_space<vmem>>) attributes {dimension_semantics = [#tpu.dimension_semantics<parallel>], iteration_bounds = array<i64: 1>, scalar_prefetch = 0 : i64, scratch_operands = 0 : i64, tpu.core_type = #tpu.core_type<tc>, window_params = [{transform_indices = @transform_0, window_bounds = array<i64: 16, 32>}, {pipeline_mode = #tpu.pipeline_mode<synchronous>, transform_indices = @transform_1, window_bounds = array<i64: 1, 32>}, {pipeline_mode = #tpu.pipeline_mode<synchronous>, transform_indices = @transform_2, window_bounds = array<i64: 1, 32>}, {transform_indices = @transform_3, window_bounds = array<i64: 16, 32>}]} {
    %c0 = arith.constant 0 : index
    %c0_0 = arith.constant 0 : index
    %0 = vector.load %arg1[%c0, %c0_0] : memref<16x32xf32, #tpu.memory_space<vmem>>, vector<16x32xf32>
    %cst = arith.constant dense<0.000000e+00> : vector<16xf32>
    %1 = vector.multi_reduction <add>, %0, %cst [1] : vector<16x32xf32> to vector<16xf32>
    %2 = vector.shape_cast %1 : vector<16xf32> to vector<16x1xf32>
    %cst_1 = arith.constant 3.200000e+01 : f32
    %3 = vector.broadcast %cst_1 : f32 to vector<16x1xf32>
    %4 = arith.divf %2, %3 : vector<16x1xf32>
    %5 = vector.broadcast %4 : vector<16x1xf32> to vector<16x32xf32>
    %6 = arith.subf %0, %5 : vector<16x32xf32>
    %7 = arith.mulf %6, %6 : vector<16x32xf32>
    %cst_2 = arith.constant dense<0.000000e+00> : vector<16xf32>
    %8 = vector.multi_reduction <add>, %7, %cst_2 [1] : vector<16x32xf32> to vector<16xf32>
    %9 = vector.shape_cast %8 : vector<16xf32> to vector<16x1xf32>
    %cst_3 = arith.constant 3.200000e+01 : f32
    %10 = vector.broadcast %cst_3 : f32 to vector<16x1xf32>
    %11 = arith.divf %9, %10 : vector<16x1xf32>
    %12 = vector.broadcast %4 : vector<16x1xf32> to vector<16x32xf32>
    %13 = arith.subf %0, %12 : vector<16x32xf32>
    %cst_4 = arith.constant 9.99999996E-13 : f32
    %14 = vector.broadcast %cst_4 : f32 to vector<16x1xf32>
    %15 = arith.addf %11, %14 : vector<16x1xf32>
    %16 = math.rsqrt %15 : vector<16x1xf32>
    %17 = vector.broadcast %16 : vector<16x1xf32> to vector<16x32xf32>
    %18 = arith.mulf %13, %17 : vector<16x32xf32>
    %c0_5 = arith.constant 0 : index
    %c0_6 = arith.constant 0 : index
    %19 = vector.load %arg2[%c0_5, %c0_6] : memref<1x32xf32, #tpu.memory_space<vmem>>, vector<1x32xf32>
    %20 = vector.broadcast %19 : vector<1x32xf32> to vector<16x32xf32>
    %21 = arith.mulf %18, %20 : vector<16x32xf32>
    %c0_7 = arith.constant 0 : index
    %c0_8 = arith.constant 0 : index
    %22 = vector.load %arg3[%c0_7, %c0_8] : memref<1x32xf32, #tpu.memory_space<vmem>>, vector<1x32xf32>
    %23 = vector.broadcast %22 : vector<1x32xf32> to vector<16x32xf32>
    %24 = arith.addf %21, %23 : vector<16x32xf32>
    %25 = arith.truncf %24 : vector<16x32xf32> to vector<16x32xbf16>
    %c0_9 = arith.constant 0 : index
    %c0_10 = arith.constant 0 : index
    %26 = vector.load %arg4[%c0_9, %c0_10] : memref<16x32xbf16, #tpu.memory_space<vmem>>, vector<16x32xbf16>
    tpu.vector_store %arg4[%c0_9, %c0_10], %25 {strides = array<i32>} : memref<16x32xbf16, #tpu.memory_space<vmem>>, vector<16x32xbf16>,
    return
  }
  func.func @transform_0(%arg0: i32) -> (i32, i32) {
    %c0_i32 = arith.constant 0 : i32
    %c0_i32_0 = arith.constant 0 : i32
    return %arg0, %c0_i32 : i32, i32
  }
  func.func @transform_1(%arg0: i32) -> (i32, i32) {
    %c0_i32 = arith.constant 0 : i32
    %c0_i32_0 = arith.constant 0 : i32
    %c0_i32_1 = arith.constant 0 : i32
    return %c0_i32, %c0_i32_0 : i32, i32
  }
  func.func @transform_2(%arg0: i32) -> (i32, i32) {
    %c0_i32 = arith.constant 0 : i32
    %c0_i32_0 = arith.constant 0 : i32
    %c0_i32_1 = arith.constant 0 : i32
    return %c0_i32, %c0_i32_0 : i32, i32
  }
  func.func @transform_3(%arg0: i32) -> (i32, i32) {
    %c0_i32 = arith.constant 0 : i32
    %c0_i32_0 = arith.constant 0 : i32
    return %arg0, %c0_i32 : i32, i32
  }
}

module attributes {stable_mosaic.version = 11 : i64} {
  func.func @_dense_kernel(%arg0: i32, %arg1: i32, %arg2: i32, %arg3: memref<16x32xbf16, #tpu.memory_space<vmem>>, %arg4: memref<32x96xbf16, #tpu.memory_space<vmem>>, %arg5: memref<1x96xf32, #tpu.memory_space<vmem>>, %arg6: memref<16x96xbf16, #tpu.memory_space<vmem>>, %arg7: memref<16x96xf32, #tpu.memory_space<vmem>>) attributes {dimension_semantics = [#tpu.dimension_semantics<parallel>, #tpu.dimension_semantics<parallel>, #tpu.dimension_semantics<arbitrary>], iteration_bounds = array<i64: 1, 1, 1>, scalar_prefetch = 0 : i64, scratch_operands = 1 : i64, tpu.core_type = #tpu.core_type<tc>, window_params = [{transform_indices = @transform_0, window_bounds = array<i64: 16, 32>}, {transform_indices = @transform_1, window_bounds = array<i64: 32, 96>}, {transform_indices = @transform_2, window_bounds = array<i64: 1, 96>}, {transform_indices = @transform_3, window_bounds = array<i64: 16, 96>}]} {
    %c0_i32 = arith.constant 0 : i32
    %0 = arith.cmpi eq, %arg2, %c0_i32 : i32
    %1 = arith.extui %0 : i1 to i32
    %c0_i32_0 = arith.constant 0 : i32
    %2 = arith.cmpi ne, %1, %c0_i32_0 : i32
    scf.if %2 {
      %cst_10 = arith.constant 0.000000e+00 : f32
      %12 = vector.broadcast %cst_10 : f32 to vector<16x96xf32>
      %c0_11 = arith.constant 0 : index
      %c0_12 = arith.constant 0 : index
      %13 = vector.load %arg7[%c0_11, %c0_12] : memref<16x96xf32, #tpu.memory_space<vmem>>, vector<16x96xf32>
      tpu.vector_store %arg7[%c0_11, %c0_12], %12 {strides = array<i32>} : memref<16x96xf32, #tpu.memory_space<vmem>>, vector<16x96xf32>,
    } else {
    }
    %c0 = arith.constant 0 : index
    %c0_1 = arith.constant 0 : index
    %3 = vector.load %arg7[%c0, %c0_1] : memref<16x96xf32, #tpu.memory_space<vmem>>, vector<16x96xf32>
    %c0_2 = arith.constant 0 : index
    %c0_3 = arith.constant 0 : index
    %4 = vector.load %arg3[%c0_2, %c0_3] : memref<16x32xbf16, #tpu.memory_space<vmem>>, vector<16x32xbf16>
    %c0_4 = arith.constant 0 : index
    %c0_5 = arith.constant 0 : index
    %5 = vector.load %arg4[%c0_4, %c0_5] : memref<32x96xbf16, #tpu.memory_space<vmem>>, vector<32x96xbf16>
    %cst = arith.constant dense<0.000000e+00> : vector<16x96xf32>
    %6 = tpu.matmul %4, %5, %cst {dimension_numbers = #tpu.dot_dimension_numbers<[1], [0], [0], [1], [0, 0, 1, 1], [], []>} : vector<16x32xbf16>, vector<32x96xbf16>, vector<16x96xf32> -> vector<16x96xf32>
    %7 = arith.addf %3, %6 : vector<16x96xf32>
    %c0_6 = arith.constant 0 : index
    %c0_7 = arith.constant 0 : index
    %8 = vector.load %arg7[%c0_6, %c0_7] : memref<16x96xf32, #tpu.memory_space<vmem>>, vector<16x96xf32>
    tpu.vector_store %arg7[%c0_6, %c0_7], %7 {strides = array<i32>} : memref<16x96xf32, #tpu.memory_space<vmem>>, vector<16x96xf32>,
    %c0_i32_8 = arith.constant 0 : i32
    %9 = arith.cmpi eq, %arg2, %c0_i32_8 : i32
    %10 = arith.extui %9 : i1 to i32
    %c0_i32_9 = arith.constant 0 : i32
    %11 = arith.cmpi ne, %10, %c0_i32_9 : i32
    scf.if %11 {
      %c0_10 = arith.constant 0 : index
      %c0_11 = arith.constant 0 : index
      %12 = vector.load %arg7[%c0_10, %c0_11] : memref<16x96xf32, #tpu.memory_space<vmem>>, vector<16x96xf32>
      %c0_12 = arith.constant 0 : index
      %c0_13 = arith.constant 0 : index
      %13 = vector.load %arg5[%c0_12, %c0_13] : memref<1x96xf32, #tpu.memory_space<vmem>>, vector<1x96xf32>
      %14 = vector.broadcast %13 : vector<1x96xf32> to vector<16x96xf32>
      %15 = arith.addf %12, %14 : vector<16x96xf32>
      %16 = arith.truncf %15 : vector<16x96xf32> to vector<16x96xbf16>
      %c0_14 = arith.constant 0 : index
      %c0_15 = arith.constant 0 : index
      %17 = vector.load %arg6[%c0_14, %c0_15] : memref<16x96xbf16, #tpu.memory_space<vmem>>, vector<16x96xbf16>
      tpu.vector_store %arg6[%c0_14, %c0_15], %16 {strides = array<i32>} : memref<16x96xbf16, #tpu.memory_space<vmem>>, vector<16x96xbf16>,
    } else {
    }
    return
  }
  func.func @transform_0(%arg0: i32, %arg1: i32, %arg2: i32) -> (i32, i32) {
    %c0_i32 = arith.constant 0 : i32
    return %arg0, %arg2 : i32, i32
  }
  func.func @transform_1(%arg0: i32, %arg1: i32, %arg2: i32) -> (i32, i32) {
    %c0_i32 = arith.constant 0 : i32
    return %arg2, %arg1 : i32, i32
  }
  func.func @transform_2(%arg0: i32, %arg1: i32, %arg2: i32) -> (i32, i32) {
    %c0_i32 = arith.constant 0 : i32
    %c0_i32_0 = arith.constant 0 : i32
    return %c0_i32, %arg1 : i32, i32
  }
  func.func @transform_3(%arg0: i32, %arg1: i32, %arg2: i32) -> (i32, i32) {
    %c0_i32 = arith.constant 0 : i32
    return %arg0, %arg1 : i32, i32
  }
}

module attributes {stable_mosaic.version = 11 : i64} {
  func.func @_attn_kernel(%arg0: i32, %arg1: i32, %arg2: memref<3x1x1x8x16xbf16, #tpu.memory_space<vmem>>, %arg3: memref<1x1x8xf32, #tpu.memory_space<vmem>>, %arg4: memref<1x1x8x16xbf16, #tpu.memory_space<vmem>>) attributes {dimension_semantics = [#tpu.dimension_semantics<parallel>, #tpu.dimension_semantics<parallel>], iteration_bounds = array<i64: 2, 2>, scalar_prefetch = 0 : i64, scratch_operands = 0 : i64, tpu.core_type = #tpu.core_type<tc>, window_params = [{transform_indices = @transform_0, window_bounds = array<i64: 3, 1, 1, 8, 16>}, {transform_indices = @transform_1, window_bounds = array<i64: 1, 1, 8>}, {transform_indices = @transform_2, window_bounds = array<i64: 1, 1, 8, 16>}]} {
    %c0 = arith.constant 0 : index
    %c0_0 = arith.constant 0 : index
    %c0_1 = arith.constant 0 : index
    %c0_2 = arith.constant 0 : index
    %c0_3 = arith.constant 0 : index
    %0 = vector.load %arg2[%c0, %c0_0, %c0_1, %c0_2, %c0_3] : memref<3x1x1x8x16xbf16, #tpu.memory_space<vmem>>, vector<1x1x1x8x16xbf16>
    %1 = vector.shape_cast %0 : vector<1x1x1x8x16xbf16> to vector<8x16xbf16>
    %2 = arith.extf %1 : vector<8x16xbf16> to vector<8x16xf32>
    %cst = arith.constant 2.500000e-01 : f32
    %3 = vector.broadcast %cst : f32 to vector<8x16xf32>
    %4 = arith.mulf %2, %3 : vector<8x16xf32>
    %5 = arith.truncf %4 : vector<8x16xf32> to vector<8x16xbf16>
    %c1 = arith.constant 1 : index
    %c0_4 = arith.constant 0 : index
    %c0_5 = arith.constant 0 : index
    %c0_6 = arith.constant 0 : index
    %c0_7 = arith.constant 0 : index
    %6 = vector.load %arg2[%c1, %c0_4, %c0_5, %c0_6, %c0_7] : memref<3x1x1x8x16xbf16, #tpu.memory_space<vmem>>, vector<1x1x1x8x16xbf16>
    %7 = vector.shape_cast %6 : vector<1x1x1x8x16xbf16> to vector<8x16xbf16>
    %c2 = arith.constant 2 : index
    %c0_8 = arith.constant 0 : index
    %c0_9 = arith.constant 0 : index
    %c0_10 = arith.constant 0 : index
    %c0_11 = arith.constant 0 : index
    %8 = vector.load %arg2[%c2, %c0_8, %c0_9, %c0_10, %c0_11] : memref<3x1x1x8x16xbf16, #tpu.memory_space<vmem>>, vector<1x1x1x8x16xbf16>
    %9 = vector.shape_cast %8 : vector<1x1x1x8x16xbf16> to vector<8x16xbf16>
    %c0_12 = arith.constant 0 : index
    %c0_13 = arith.constant 0 : index
    %c0_14 = arith.constant 0 : index
    %10 = vector.load %arg3[%c0_12, %c0_13, %c0_14] : memref<1x1x8xf32, #tpu.memory_space<vmem>>, vector<1x1x8xf32>
    %11 = vector.shape_cast %10 : vector<1x1x8xf32> to vector<1x8xf32>
    %cst_15 = arith.constant dense<0.000000e+00> : vector<8x8xf32>
    %12 = tpu.matmul %5, %7, %cst_15 {dimension_numbers = #tpu.dot_dimension_numbers<[1], [1], [0], [0], [0, 0, 1, 0], [], []>} : vector<8x16xbf16>, vector<8x16xbf16>, vector<8x8xf32> -> vector<8x8xf32>
    %13 = vector.broadcast %11 : vector<1x8xf32> to vector<8x8xf32>
    %14 = arith.addf %12, %13 : vector<8x8xf32>
    %cst_16 = arith.constant dense<0xFF800000> : vector<8xf32>
    %15 = vector.multi_reduction <maximumf>, %14, %cst_16 [1] : vector<8x8xf32> to vector<8xf32>
    %16 = vector.shape_cast %15 : vector<8xf32> to vector<8x1xf32>
    %17 = vector.broadcast %16 : vector<8x1xf32> to vector<8x8xf32>
    %18 = arith.subf %14, %17 : vector<8x8xf32>
    %19 = math.exp %18 : vector<8x8xf32>
    %cst_17 = arith.constant dense<0.000000e+00> : vector<8xf32>
    %20 = vector.multi_reduction <add>, %19, %cst_17 [1] : vector<8x8xf32> to vector<8xf32>
    %21 = vector.shape_cast %20 : vector<8xf32> to vector<8x1xf32>
    %22 = tpu.reciprocal %21 {approx = true} : vector<8x1xf32> -> vector<8x1xf32>
    %23 = vector.broadcast %22 : vector<8x1xf32> to vector<8x8xf32>
    %24 = arith.mulf %19, %23 : vector<8x8xf32>
    %25 = arith.truncf %24 : vector<8x8xf32> to vector<8x8xbf16>
    %cst_18 = arith.constant dense<0.000000e+00> : vector<8x16xf32>
    %26 = tpu.matmul %25, %9, %cst_18 {dimension_numbers = #tpu.dot_dimension_numbers<[1], [0], [0], [1], [0, 0, 1, 1], [], []>} : vector<8x8xbf16>, vector<8x16xbf16>, vector<8x16xf32> -> vector<8x16xf32>
    %27 = arith.truncf %26 : vector<8x16xf32> to vector<8x16xbf16>
    %c0_19 = arith.constant 0 : index
    %c0_20 = arith.constant 0 : index
    %c0_21 = arith.constant 0 : index
    %c0_22 = arith.constant 0 : index
    %28 = vector.load %arg4[%c0_19, %c0_20, %c0_21, %c0_22] : memref<1x1x8x16xbf16, #tpu.memory_space<vmem>>, vector<1x1x8x16xbf16>
    %29 = vector.shape_cast %28 : vector<1x1x8x16xbf16> to vector<8x16xbf16>
    %30 = vector.shape_cast %27 : vector<8x16xbf16> to vector<1x1x8x16xbf16>
    tpu.vector_store %arg4[%c0_19, %c0_20, %c0_21, %c0_22], %30 {strides = array<i32>} : memref<1x1x8x16xbf16, #tpu.memory_space<vmem>>, vector<1x1x8x16xbf16>,
    return
  }
  func.func @transform_0(%arg0: i32, %arg1: i32) -> (i32, i32, i32, i32, i32) {
    %c0_i32 = arith.constant 0 : i32
    %c0_i32_0 = arith.constant 0 : i32
    %c0_i32_1 = arith.constant 0 : i32
    %c0_i32_2 = arith.constant 0 : i32
    return %c0_i32, %arg0, %arg1, %c0_i32_0, %c0_i32_1 : i32, i32, i32, i32, i32
  }
  func.func @transform_1(%arg0: i32, %arg1: i32) -> (i32, i32, i32) {
    %c0_i32 = arith.constant 0 : i32
    %c0_i32_0 = arith.constant 0 : i32
    %c0_i32_1 = arith.constant 0 : i32
    return %arg0, %c0_i32, %c0_i32_0 : i32, i32, i32
  }
  func.func @transform_2(%arg0: i32, %arg1: i32) -> (i32, i32, i32, i32) {
    %c0_i32 = arith.constant 0 : i32
    %c0_i32_0 = arith.constant 0 : i32
    %c0_i32_1 = arith.constant 0 : i32
    return %arg0, %arg1, %c0_i32, %c0_i32_0 : i32, i32, i32, i32
  }
}

module attributes {stable_mosaic.version = 11 : i64} {
  func.func @_dense_ln_kernel(%arg0: i32, %arg1: i32, %arg2: memref<16x32xbf16, #tpu.memory_space<vmem>>, %arg3: memref<32x32xbf16, #tpu.memory_space<vmem>>, %arg4: memref<1x32xf32, #tpu.memory_space<vmem>>, %arg5: memref<16x32xbf16, #tpu.memory_space<vmem>>, %arg6: memref<1x32xf32, #tpu.memory_space<vmem>>, %arg7: memref<1x32xf32, #tpu.memory_space<vmem>>, %arg8: memref<16x32xbf16, #tpu.memory_space<vmem>>, %arg9: memref<16x32xf32, #tpu.memory_space<vmem>>) attributes {dimension_semantics = [#tpu.dimension_semantics<parallel>, #tpu.dimension_semantics<arbitrary>], iteration_bounds = array<i64: 1, 1>, scalar_prefetch = 0 : i64, scratch_operands = 1 : i64, tpu.core_type = #tpu.core_type<tc>, window_params = [{transform_indices = @transform_0, window_bounds = array<i64: 16, 32>}, {transform_indices = @transform_1, window_bounds = array<i64: 32, 32>}, {pipeline_mode = #tpu.pipeline_mode<synchronous>, transform_indices = @transform_2, window_bounds = array<i64: 1, 32>}, {transform_indices = @transform_3, window_bounds = array<i64: 16, 32>}, {pipeline_mode = #tpu.pipeline_mode<synchronous>, transform_indices = @transform_4, window_bounds = array<i64: 1, 32>}, {pipeline_mode = #tpu.pipeline_mode<synchronous>, transform_indices = @transform_5, window_bounds = array<i64: 1, 32>}, {transform_indices = @transform_6, window_bounds = array<i64: 16, 32>}]} {
    %c0_i32 = arith.constant 0 : i32
    %0 = arith.cmpi eq, %arg1, %c0_i32 : i32
    %1 = arith.extui %0 : i1 to i32
    %c0_i32_0 = arith.constant 0 : i32
    %2 = arith.cmpi ne, %1, %c0_i32_0 : i32
    scf.if %2 {
      %cst_10 = arith.constant 0.000000e+00 : f32
      %12 = vector.broadcast %cst_10 : f32 to vector<16x32xf32>
      %c0_11 = arith.constant 0 : index
      %c0_12 = arith.constant 0 : index
      %13 = vector.load %arg9[%c0_11, %c0_12] : memref<16x32xf32, #tpu.memory_space<vmem>>, vector<16x32xf32>
      tpu.vector_store %arg9[%c0_11, %c0_12], %12 {strides = array<i32>} : memref<16x32xf32, #tpu.memory_space<vmem>>, vector<16x32xf32>,
    } else {
    }
    %c0 = arith.constant 0 : index
    %c0_1 = arith.constant 0 : index
    %3 = vector.load %arg9[%c0, %c0_1] : memref<16x32xf32, #tpu.memory_space<vmem>>, vector<16x32xf32>
    %c0_2 = arith.constant 0 : index
    %c0_3 = arith.constant 0 : index
    %4 = vector.load %arg2[%c0_2, %c0_3] : memref<16x32xbf16, #tpu.memory_space<vmem>>, vector<16x32xbf16>
    %c0_4 = arith.constant 0 : index
    %c0_5 = arith.constant 0 : index
    %5 = vector.load %arg3[%c0_4, %c0_5] : memref<32x32xbf16, #tpu.memory_space<vmem>>, vector<32x32xbf16>
    %cst = arith.constant dense<0.000000e+00> : vector<16x32xf32>
    %6 = tpu.matmul %4, %5, %cst {dimension_numbers = #tpu.dot_dimension_numbers<[1], [0], [0], [1], [0, 0, 1, 1], [], []>} : vector<16x32xbf16>, vector<32x32xbf16>, vector<16x32xf32> -> vector<16x32xf32>
    %7 = arith.addf %3, %6 : vector<16x32xf32>
    %c0_6 = arith.constant 0 : index
    %c0_7 = arith.constant 0 : index
    %8 = vector.load %arg9[%c0_6, %c0_7] : memref<16x32xf32, #tpu.memory_space<vmem>>, vector<16x32xf32>
    tpu.vector_store %arg9[%c0_6, %c0_7], %7 {strides = array<i32>} : memref<16x32xf32, #tpu.memory_space<vmem>>, vector<16x32xf32>,
    %c0_i32_8 = arith.constant 0 : i32
    %9 = arith.cmpi eq, %arg1, %c0_i32_8 : i32
    %10 = arith.extui %9 : i1 to i32
    %c0_i32_9 = arith.constant 0 : i32
    %11 = arith.cmpi ne, %10, %c0_i32_9 : i32
    scf.if %11 {
      %c0_10 = arith.constant 0 : index
      %c0_11 = arith.constant 0 : index
      %12 = vector.load %arg9[%c0_10, %c0_11] : memref<16x32xf32, #tpu.memory_space<vmem>>, vector<16x32xf32>
      %c0_12 = arith.constant 0 : index
      %c0_13 = arith.constant 0 : index
      %13 = vector.load %arg4[%c0_12, %c0_13] : memref<1x32xf32, #tpu.memory_space<vmem>>, vector<1x32xf32>
      %14 = vector.broadcast %13 : vector<1x32xf32> to vector<16x32xf32>
      %15 = arith.addf %12, %14 : vector<16x32xf32>
      %c0_14 = arith.constant 0 : index
      %c0_15 = arith.constant 0 : index
      %16 = vector.load %arg5[%c0_14, %c0_15] : memref<16x32xbf16, #tpu.memory_space<vmem>>, vector<16x32xbf16>
      %17 = arith.extf %16 : vector<16x32xbf16> to vector<16x32xf32>
      %18 = arith.addf %15, %17 : vector<16x32xf32>
      %cst_16 = arith.constant dense<0.000000e+00> : vector<16xf32>
      %19 = vector.multi_reduction <add>, %18, %cst_16 [1] : vector<16x32xf32> to vector<16xf32>
      %20 = vector.shape_cast %19 : vector<16xf32> to vector<16x1xf32>
      %cst_17 = arith.constant 3.200000e+01 : f32
      %21 = vector.broadcast %cst_17 : f32 to vector<16x1xf32>
      %22 = arith.divf %20, %21 : vector<16x1xf32>
      %23 = vector.broadcast %22 : vector<16x1xf32> to vector<16x32xf32>
      %24 = arith.subf %18, %23 : vector<16x32xf32>
      %25 = arith.mulf %24, %24 : vector<16x32xf32>
      %cst_18 = arith.constant dense<0.000000e+00> : vector<16xf32>
      %26 = vector.multi_reduction <add>, %25, %cst_18 [1] : vector<16x32xf32> to vector<16xf32>
      %27 = vector.shape_cast %26 : vector<16xf32> to vector<16x1xf32>
      %cst_19 = arith.constant 3.200000e+01 : f32
      %28 = vector.broadcast %cst_19 : f32 to vector<16x1xf32>
      %29 = arith.divf %27, %28 : vector<16x1xf32>
      %30 = vector.broadcast %22 : vector<16x1xf32> to vector<16x32xf32>
      %31 = arith.subf %18, %30 : vector<16x32xf32>
      %cst_20 = arith.constant 9.99999996E-13 : f32
      %32 = vector.broadcast %cst_20 : f32 to vector<16x1xf32>
      %33 = arith.addf %29, %32 : vector<16x1xf32>
      %34 = math.rsqrt %33 : vector<16x1xf32>
      %35 = vector.broadcast %34 : vector<16x1xf32> to vector<16x32xf32>
      %36 = arith.mulf %31, %35 : vector<16x32xf32>
      %c0_21 = arith.constant 0 : index
      %c0_22 = arith.constant 0 : index
      %37 = vector.load %arg6[%c0_21, %c0_22] : memref<1x32xf32, #tpu.memory_space<vmem>>, vector<1x32xf32>
      %38 = vector.broadcast %37 : vector<1x32xf32> to vector<16x32xf32>
      %39 = arith.mulf %36, %38 : vector<16x32xf32>
      %c0_23 = arith.constant 0 : index
      %c0_24 = arith.constant 0 : index
      %40 = vector.load %arg7[%c0_23, %c0_24] : memref<1x32xf32, #tpu.memory_space<vmem>>, vector<1x32xf32>
      %41 = vector.broadcast %40 : vector<1x32xf32> to vector<16x32xf32>
      %42 = arith.addf %39, %41 : vector<16x32xf32>
      %43 = arith.truncf %42 : vector<16x32xf32> to vector<16x32xbf16>
      %c0_25 = arith.constant 0 : index
      %c0_26 = arith.constant 0 : index
      %44 = vector.load %arg8[%c0_25, %c0_26] : memref<16x32xbf16, #tpu.memory_space<vmem>>, vector<16x32xbf16>
      tpu.vector_store %arg8[%c0_25, %c0_26], %43 {strides = array<i32>} : memref<16x32xbf16, #tpu.memory_space<vmem>>, vector<16x32xbf16>,
    } else {
    }
    return
  }
  func.func @transform_0(%arg0: i32, %arg1: i32) -> (i32, i32) {
    %c0_i32 = arith.constant 0 : i32
    return %arg0, %arg1 : i32, i32
  }
  func.func @transform_1(%arg0: i32, %arg1: i32) -> (i32, i32) {
    %c0_i32 = arith.constant 0 : i32
    %c0_i32_0 = arith.constant 0 : i32
    return %arg1, %c0_i32 : i32, i32
  }
  func.func @transform_2(%arg0: i32, %arg1: i32) -> (i32, i32) {
    %c0_i32 = arith.constant 0 : i32
    %c0_i32_0 = arith.constant 0 : i32
    %c0_i32_1 = arith.constant 0 : i32
    return %c0_i32, %c0_i32_0 : i32, i32
  }
  func.func @transform_3(%arg0: i32, %arg1: i32) -> (i32, i32) {
    %c0_i32 = arith.constant 0 : i32
    %c0_i32_0 = arith.constant 0 : i32
    return %arg0, %c0_i32 : i32, i32
  }
  func.func @transform_4(%arg0: i32, %arg1: i32) -> (i32, i32) {
    %c0_i32 = arith.constant 0 : i32
    %c0_i32_0 = arith.constant 0 : i32
    %c0_i32_1 = arith.constant 0 : i32
    return %c0_i32, %c0_i32_0 : i32, i32
  }
  func.func @transform_5(%arg0: i32, %arg1: i32) -> (i32, i32) {
    %c0_i32 = arith.constant 0 : i32
    %c0_i32_0 = arith.constant 0 : i32
    %c0_i32_1 = arith.constant 0 : i32
    return %c0_i32, %c0_i32_0 : i32, i32
  }
  func.func @transform_6(%arg0: i32, %arg1: i32) -> (i32, i32) {
    %c0_i32 = arith.constant 0 : i32
    %c0_i32_0 = arith.constant 0 : i32
    return %arg0, %c0_i32 : i32, i32
  }
}

module attributes {stable_mosaic.version = 11 : i64} {
  func.func @_dense_ln_kernel(%arg0: i32, %arg1: i32, %arg2: memref<16x32xbf16, #tpu.memory_space<vmem>>, %arg3: memref<32x32xbf16, #tpu.memory_space<vmem>>, %arg4: memref<1x32xf32, #tpu.memory_space<vmem>>, %arg5: memref<1x32xf32, #tpu.memory_space<vmem>>, %arg6: memref<1x32xf32, #tpu.memory_space<vmem>>, %arg7: memref<16x32xbf16, #tpu.memory_space<vmem>>, %arg8: memref<16x32xf32, #tpu.memory_space<vmem>>) attributes {dimension_semantics = [#tpu.dimension_semantics<parallel>, #tpu.dimension_semantics<arbitrary>], iteration_bounds = array<i64: 1, 1>, scalar_prefetch = 0 : i64, scratch_operands = 1 : i64, tpu.core_type = #tpu.core_type<tc>, window_params = [{transform_indices = @transform_0, window_bounds = array<i64: 16, 32>}, {transform_indices = @transform_1, window_bounds = array<i64: 32, 32>}, {pipeline_mode = #tpu.pipeline_mode<synchronous>, transform_indices = @transform_2, window_bounds = array<i64: 1, 32>}, {pipeline_mode = #tpu.pipeline_mode<synchronous>, transform_indices = @transform_3, window_bounds = array<i64: 1, 32>}, {pipeline_mode = #tpu.pipeline_mode<synchronous>, transform_indices = @transform_4, window_bounds = array<i64: 1, 32>}, {transform_indices = @transform_5, window_bounds = array<i64: 16, 32>}]} {
    %c0_i32 = arith.constant 0 : i32
    %0 = arith.cmpi eq, %arg1, %c0_i32 : i32
    %1 = arith.extui %0 : i1 to i32
    %c0_i32_0 = arith.constant 0 : i32
    %2 = arith.cmpi ne, %1, %c0_i32_0 : i32
    scf.if %2 {
      %cst_10 = arith.constant 0.000000e+00 : f32
      %12 = vector.broadcast %cst_10 : f32 to vector<16x32xf32>
      %c0_11 = arith.constant 0 : index
      %c0_12 = arith.constant 0 : index
      %13 = vector.load %arg8[%c0_11, %c0_12] : memref<16x32xf32, #tpu.memory_space<vmem>>, vector<16x32xf32>
      tpu.vector_store %arg8[%c0_11, %c0_12], %12 {strides = array<i32>} : memref<16x32xf32, #tpu.memory_space<vmem>>, vector<16x32xf32>,
    } else {
    }
    %c0 = arith.constant 0 : index
    %c0_1 = arith.constant 0 : index
    %3 = vector.load %arg8[%c0, %c0_1] : memref<16x32xf32, #tpu.memory_space<vmem>>, vector<16x32xf32>
    %c0_2 = arith.constant 0 : index
    %c0_3 = arith.constant 0 : index
    %4 = vector.load %arg2[%c0_2, %c0_3] : memref<16x32xbf16, #tpu.memory_space<vmem>>, vector<16x32xbf16>
    %c0_4 = arith.constant 0 : index
    %c0_5 = arith.constant 0 : index
    %5 = vector.load %arg3[%c0_4, %c0_5] : memref<32x32xbf16, #tpu.memory_space<vmem>>, vector<32x32xbf16>
    %cst = arith.constant dense<0.000000e+00> : vector<16x32xf32>
    %6 = tpu.matmul %4, %5, %cst {dimension_numbers = #tpu.dot_dimension_numbers<[1], [0], [0], [1], [0, 0, 1, 1], [], []>} : vector<16x32xbf16>, vector<32x32xbf16>, vector<16x32xf32> -> vector<16x32xf32>
    %7 = arith.addf %3, %6 : vector<16x32xf32>
    %c0_6 = arith.constant 0 : index
    %c0_7 = arith.constant 0 : index
    %8 = vector.load %arg8[%c0_6, %c0_7] : memref<16x32xf32, #tpu.memory_space<vmem>>, vector<16x32xf32>
    tpu.vector_store %arg8[%c0_6, %c0_7], %7 {strides = array<i32>} : memref<16x32xf32, #tpu.memory_space<vmem>>, vector<16x32xf32>,
    %c0_i32_8 = arith.constant 0 : i32
    %9 = arith.cmpi eq, %arg1, %c0_i32_8 : i32
    %10 = arith.extui %9 : i1 to i32
    %c0_i32_9 = arith.constant 0 : i32
    %11 = arith.cmpi ne, %10, %c0_i32_9 : i32
    scf.if %11 {
      %c0_10 = arith.constant 0 : index
      %c0_11 = arith.constant 0 : index
      %12 = vector.load %arg8[%c0_10, %c0_11] : memref<16x32xf32, #tpu.memory_space<vmem>>, vector<16x32xf32>
      %c0_12 = arith.constant 0 : index
      %c0_13 = arith.constant 0 : index
      %13 = vector.load %arg4[%c0_12, %c0_13] : memref<1x32xf32, #tpu.memory_space<vmem>>, vector<1x32xf32>
      %14 = vector.broadcast %13 : vector<1x32xf32> to vector<16x32xf32>
      %15 = arith.addf %12, %14 : vector<16x32xf32>
      %cst_14 = arith.constant 5.000000e-01 : f32
      %16 = vector.broadcast %cst_14 : f32 to vector<16x32xf32>
      %17 = arith.mulf %16, %15 : vector<16x32xf32>
      %cst_15 = arith.constant 4.471500e-02 : f32
      %18 = vector.broadcast %cst_15 : f32 to vector<16x32xf32>
      %19 = arith.mulf %18, %15 : vector<16x32xf32>
      %20 = arith.mulf %19, %15 : vector<16x32xf32>
      %21 = arith.mulf %20, %15 : vector<16x32xf32>
      %22 = arith.addf %15, %21 : vector<16x32xf32>
      %cst_16 = arith.constant 0.797884583 : f32
      %23 = vector.broadcast %cst_16 : f32 to vector<16x32xf32>
      %24 = arith.mulf %23, %22 : vector<16x32xf32>
      %25 = math.tanh %24 : vector<16x32xf32>
      %cst_17 = arith.constant 1.000000e+00 : f32
      %26 = vector.broadcast %cst_17 : f32 to vector<16x32xf32>
      %27 = arith.addf %26, %25 : vector<16x32xf32>
      %28 = arith.mulf %17, %27 : vector<16x32xf32>
      %cst_18 = arith.constant dense<0.000000e+00> : vector<16xf32>
      %29 = vector.multi_reduction <add>, %28, %cst_18 [1] : vector<16x32xf32> to vector<16xf32>
      %30 = vector.shape_cast %29 : vector<16xf32> to vector<16x1xf32>
      %cst_19 = arith.constant 3.200000e+01 : f32
      %31 = vector.broadcast %cst_19 : f32 to vector<16x1xf32>
      %32 = arith.divf %30, %31 : vector<16x1xf32>
      %33 = vector.broadcast %32 : vector<16x1xf32> to vector<16x32xf32>
      %34 = arith.subf %28, %33 : vector<16x32xf32>
      %35 = arith.mulf %34, %34 : vector<16x32xf32>
      %cst_20 = arith.constant dense<0.000000e+00> : vector<16xf32>
      %36 = vector.multi_reduction <add>, %35, %cst_20 [1] : vector<16x32xf32> to vector<16xf32>
      %37 = vector.shape_cast %36 : vector<16xf32> to vector<16x1xf32>
      %cst_21 = arith.constant 3.200000e+01 : f32
      %38 = vector.broadcast %cst_21 : f32 to vector<16x1xf32>
      %39 = arith.divf %37, %38 : vector<16x1xf32>
      %40 = vector.broadcast %32 : vector<16x1xf32> to vector<16x32xf32>
      %41 = arith.subf %28, %40 : vector<16x32xf32>
      %cst_22 = arith.constant 9.99999996E-13 : f32
      %42 = vector.broadcast %cst_22 : f32 to vector<16x1xf32>
      %43 = arith.addf %39, %42 : vector<16x1xf32>
      %44 = math.rsqrt %43 : vector<16x1xf32>
      %45 = vector.broadcast %44 : vector<16x1xf32> to vector<16x32xf32>
      %46 = arith.mulf %41, %45 : vector<16x32xf32>
      %c0_23 = arith.constant 0 : index
      %c0_24 = arith.constant 0 : index
      %47 = vector.load %arg5[%c0_23, %c0_24] : memref<1x32xf32, #tpu.memory_space<vmem>>, vector<1x32xf32>
      %48 = vector.broadcast %47 : vector<1x32xf32> to vector<16x32xf32>
      %49 = arith.mulf %46, %48 : vector<16x32xf32>
      %c0_25 = arith.constant 0 : index
      %c0_26 = arith.constant 0 : index
      %50 = vector.load %arg6[%c0_25, %c0_26] : memref<1x32xf32, #tpu.memory_space<vmem>>, vector<1x32xf32>
      %51 = vector.broadcast %50 : vector<1x32xf32> to vector<16x32xf32>
      %52 = arith.addf %49, %51 : vector<16x32xf32>
      %53 = arith.truncf %52 : vector<16x32xf32> to vector<16x32xbf16>
      %c0_27 = arith.constant 0 : index
      %c0_28 = arith.constant 0 : index
      %54 = vector.load %arg7[%c0_27, %c0_28] : memref<16x32xbf16, #tpu.memory_space<vmem>>, vector<16x32xbf16>
      tpu.vector_store %arg7[%c0_27, %c0_28], %53 {strides = array<i32>} : memref<16x32xbf16, #tpu.memory_space<vmem>>, vector<16x32xbf16>,
    } else {
    }
    return
  }
  func.func @transform_0(%arg0: i32, %arg1: i32) -> (i32, i32) {
    %c0_i32 = arith.constant 0 : i32
    return %arg0, %arg1 : i32, i32
  }
  func.func @transform_1(%arg0: i32, %arg1: i32) -> (i32, i32) {
    %c0_i32 = arith.constant 0 : i32
    %c0_i32_0 = arith.constant 0 : i32
    return %arg1, %c0_i32 : i32, i32
  }
  func.func @transform_2(%arg0: i32, %arg1: i32) -> (i32, i32) {
    %c0_i32 = arith.constant 0 : i32
    %c0_i32_0 = arith.constant 0 : i32
    %c0_i32_1 = arith.constant 0 : i32
    return %c0_i32, %c0_i32_0 : i32, i32
  }
  func.func @transform_3(%arg0: i32, %arg1: i32) -> (i32, i32) {
    %c0_i32 = arith.constant 0 : i32
    %c0_i32_0 = arith.constant 0 : i32
    %c0_i32_1 = arith.constant 0 : i32
    return %c0_i32, %c0_i32_0 : i32, i32
  }
  func.func @transform_4(%arg0: i32, %arg1: i32) -> (i32, i32) {
    %c0_i32 = arith.constant 0 : i32
    %c0_i32_0 = arith.constant 0 : i32
    %c0_i32_1 = arith.constant 0 : i32
    return %c0_i32, %c0_i32_0 : i32, i32
  }
  func.func @transform_5(%arg0: i32, %arg1: i32) -> (i32, i32) {
    %c0_i32 = arith.constant 0 : i32
    %c0_i32_0 = arith.constant 0 : i32
    return %arg0, %c0_i32 : i32, i32
  }
}

module attributes {stable_mosaic.version = 11 : i64} {
  func.func @_ffn_kernel(%arg0: i32, %arg1: i32, %arg2: memref<16x32xbf16, #tpu.memory_space<vmem>>, %arg3: memref<32x64xbf16, #tpu.memory_space<vmem>>, %arg4: memref<1x64xf32, #tpu.memory_space<vmem>>, %arg5: memref<64x32xbf16, #tpu.memory_space<vmem>>, %arg6: memref<1x32xf32, #tpu.memory_space<vmem>>, %arg7: memref<1x32xf32, #tpu.memory_space<vmem>>, %arg8: memref<1x32xf32, #tpu.memory_space<vmem>>, %arg9: memref<16x32xbf16, #tpu.memory_space<vmem>>, %arg10: memref<16x32xf32, #tpu.memory_space<vmem>>) attributes {dimension_semantics = [#tpu.dimension_semantics<parallel>, #tpu.dimension_semantics<arbitrary>], iteration_bounds = array<i64: 1, 1>, scalar_prefetch = 0 : i64, scratch_operands = 1 : i64, tpu.core_type = #tpu.core_type<tc>, window_params = [{transform_indices = @transform_0, window_bounds = array<i64: 16, 32>}, {transform_indices = @transform_1, window_bounds = array<i64: 32, 64>}, {transform_indices = @transform_2, window_bounds = array<i64: 1, 64>}, {transform_indices = @transform_3, window_bounds = array<i64: 64, 32>}, {pipeline_mode = #tpu.pipeline_mode<synchronous>, transform_indices = @transform_4, window_bounds = array<i64: 1, 32>}, {pipeline_mode = #tpu.pipeline_mode<synchronous>, transform_indices = @transform_5, window_bounds = array<i64: 1, 32>}, {pipeline_mode = #tpu.pipeline_mode<synchronous>, transform_indices = @transform_6, window_bounds = array<i64: 1, 32>}, {transform_indices = @transform_7, window_bounds = array<i64: 16, 32>}]} {
    %c0_i32 = arith.constant 0 : i32
    %0 = arith.cmpi eq, %arg1, %c0_i32 : i32
    %1 = arith.extui %0 : i1 to i32
    %c0_i32_0 = arith.constant 0 : i32
    %2 = arith.cmpi ne, %1, %c0_i32_0 : i32
    scf.if %2 {
      %cst_19 = arith.constant 0.000000e+00 : f32
      %31 = vector.broadcast %cst_19 : f32 to vector<16x32xf32>
      %c0_20 = arith.constant 0 : index
      %c0_21 = arith.constant 0 : index
      %32 = vector.load %arg10[%c0_20, %c0_21] : memref<16x32xf32, #tpu.memory_space<vmem>>, vector<16x32xf32>
      tpu.vector_store %arg10[%c0_20, %c0_21], %31 {strides = array<i32>} : memref<16x32xf32, #tpu.memory_space<vmem>>, vector<16x32xf32>,
    } else {
    }
    %c0 = arith.constant 0 : index
    %c0_1 = arith.constant 0 : index
    %3 = vector.load %arg2[%c0, %c0_1] : memref<16x32xbf16, #tpu.memory_space<vmem>>, vector<16x32xbf16>
    %c0_2 = arith.constant 0 : index
    %c0_3 = arith.constant 0 : index
    %4 = vector.load %arg3[%c0_2, %c0_3] : memref<32x64xbf16, #tpu.memory_space<vmem>>, vector<32x64xbf16>
    %cst = arith.constant dense<0.000000e+00> : vector<16x64xf32>
    %5 = tpu.matmul %3, %4, %cst {dimension_numbers = #tpu.dot_dimension_numbers<[1], [0], [0], [1], [0, 0, 1, 1], [], []>} : vector<16x32xbf16>, vector<32x64xbf16>, vector<16x64xf32> -> vector<16x64xf32>
    %c0_4 = arith.constant 0 : index
    %c0_5 = arith.constant 0 : index
    %6 = vector.load %arg4[%c0_4, %c0_5] : memref<1x64xf32, #tpu.memory_space<vmem>>, vector<1x64xf32>
    %7 = vector.broadcast %6 : vector<1x64xf32> to vector<16x64xf32>
    %8 = arith.addf %5, %7 : vector<16x64xf32>
    %cst_6 = arith.constant 5.000000e-01 : f32
    %9 = vector.broadcast %cst_6 : f32 to vector<16x64xf32>
    %10 = arith.mulf %9, %8 : vector<16x64xf32>
    %cst_7 = arith.constant 4.471500e-02 : f32
    %11 = vector.broadcast %cst_7 : f32 to vector<16x64xf32>
    %12 = arith.mulf %11, %8 : vector<16x64xf32>
    %13 = arith.mulf %12, %8 : vector<16x64xf32>
    %14 = arith.mulf %13, %8 : vector<16x64xf32>
    %15 = arith.addf %8, %14 : vector<16x64xf32>
    %cst_8 = arith.constant 0.797884583 : f32
    %16 = vector.broadcast %cst_8 : f32 to vector<16x64xf32>
    %17 = arith.mulf %16, %15 : vector<16x64xf32>
    %18 = math.tanh %17 : vector<16x64xf32>
    %cst_9 = arith.constant 1.000000e+00 : f32
    %19 = vector.broadcast %cst_9 : f32 to vector<16x64xf32>
    %20 = arith.addf %19, %18 : vector<16x64xf32>
    %21 = arith.mulf %10, %20 : vector<16x64xf32>
    %c0_10 = arith.constant 0 : index
    %c0_11 = arith.constant 0 : index
    %22 = vector.load %arg10[%c0_10, %c0_11] : memref<16x32xf32, #tpu.memory_space<vmem>>, vector<16x32xf32>
    %23 = arith.truncf %21 : vector<16x64xf32> to vector<16x64xbf16>
    %c0_12 = arith.constant 0 : index
    %c0_13 = arith.constant 0 : index
    %24 = vector.load %arg5[%c0_12, %c0_13] : memref<64x32xbf16, #tpu.memory_space<vmem>>, vector<64x32xbf16>
    %cst_14 = arith.constant dense<0.000000e+00> : vector<16x32xf32>
    %25 = tpu.matmul %23, %24, %cst_14 {dimension_numbers = #tpu.dot_dimension_numbers<[1], [0], [0], [1], [0, 0, 1, 1], [], []>} : vector<16x64xbf16>, vector<64x32xbf16>, vector<16x32xf32> -> vector<16x32xf32>
    %26 = arith.addf %22, %25 : vector<16x32xf32>
    %c0_15 = arith.constant 0 : index
    %c0_16 = arith.constant 0 : index
    %27 = vector.load %arg10[%c0_15, %c0_16] : memref<16x32xf32, #tpu.memory_space<vmem>>, vector<16x32xf32>
    tpu.vector_store %arg10[%c0_15, %c0_16], %26 {strides = array<i32>} : memref<16x32xf32, #tpu.memory_space<vmem>>, vector<16x32xf32>,
    %c0_i32_17 = arith.constant 0 : i32
    %28 = arith.cmpi eq, %arg1, %c0_i32_17 : i32
    %29 = arith.extui %28 : i1 to i32
    %c0_i32_18 = arith.constant 0 : i32
    %30 = arith.cmpi ne, %29, %c0_i32_18 : i32
    scf.if %30 {
      %c0_19 = arith.constant 0 : index
      %c0_20 = arith.constant 0 : index
      %31 = vector.load %arg10[%c0_19, %c0_20] : memref<16x32xf32, #tpu.memory_space<vmem>>, vector<16x32xf32>
      %c0_21 = arith.constant 0 : index
      %c0_22 = arith.constant 0 : index
      %32 = vector.load %arg6[%c0_21, %c0_22] : memref<1x32xf32, #tpu.memory_space<vmem>>, vector<1x32xf32>
      %33 = vector.broadcast %32 : vector<1x32xf32> to vector<16x32xf32>
      %34 = arith.addf %31, %33 : vector<16x32xf32>
      %c0_23 = arith.constant 0 : index
      %c0_24 = arith.constant 0 : index
      %35 = vector.load %arg2[%c0_23, %c0_24] : memref<16x32xbf16, #tpu.memory_space<vmem>>, vector<16x32xbf16>
      %36 = arith.extf %35 : vector<16x32xbf16> to vector<16x32xf32>
      %37 = arith.addf %34, %36 : vector<16x32xf32>
      %cst_25 = arith.constant dense<0.000000e+00> : vector<16xf32>
      %38 = vector.multi_reduction <add>, %37, %cst_25 [1] : vector<16x32xf32> to vector<16xf32>
      %39 = vector.shape_cast %38 : vector<16xf32> to vector<16x1xf32>
      %cst_26 = arith.constant 3.200000e+01 : f32
      %40 = vector.broadcast %cst_26 : f32 to vector<16x1xf32>
      %41 = arith.divf %39, %40 : vector<16x1xf32>
      %42 = vector.broadcast %41 : vector<16x1xf32> to vector<16x32xf32>
      %43 = arith.subf %37, %42 : vector<16x32xf32>
      %44 = arith.mulf %43, %43 : vector<16x32xf32>
      %cst_27 = arith.constant dense<0.000000e+00> : vector<16xf32>
      %45 = vector.multi_reduction <add>, %44, %cst_27 [1] : vector<16x32xf32> to vector<16xf32>
      %46 = vector.shape_cast %45 : vector<16xf32> to vector<16x1xf32>
      %cst_28 = arith.constant 3.200000e+01 : f32
      %47 = vector.broadcast %cst_28 : f32 to vector<16x1xf32>
      %48 = arith.divf %46, %47 : vector<16x1xf32>
      %49 = vector.broadcast %41 : vector<16x1xf32> to vector<16x32xf32>
      %50 = arith.subf %37, %49 : vector<16x32xf32>
      %cst_29 = arith.constant 9.99999996E-13 : f32
      %51 = vector.broadcast %cst_29 : f32 to vector<16x1xf32>
      %52 = arith.addf %48, %51 : vector<16x1xf32>
      %53 = math.rsqrt %52 : vector<16x1xf32>
      %54 = vector.broadcast %53 : vector<16x1xf32> to vector<16x32xf32>
      %55 = arith.mulf %50, %54 : vector<16x32xf32>
      %c0_30 = arith.constant 0 : index
      %c0_31 = arith.constant 0 : index
      %56 = vector.load %arg7[%c0_30, %c0_31] : memref<1x32xf32, #tpu.memory_space<vmem>>, vector<1x32xf32>
      %57 = vector.broadcast %56 : vector<1x32xf32> to vector<16x32xf32>
      %58 = arith.mulf %55, %57 : vector<16x32xf32>
      %c0_32 = arith.constant 0 : index
      %c0_33 = arith.constant 0 : index
      %59 = vector.load %arg8[%c0_32, %c0_33] : memref<1x32xf32, #tpu.memory_space<vmem>>, vector<1x32xf32>
      %60 = vector.broadcast %59 : vector<1x32xf32> to vector<16x32xf32>
      %61 = arith.addf %58, %60 : vector<16x32xf32>
      %62 = arith.truncf %61 : vector<16x32xf32> to vector<16x32xbf16>
      %c0_34 = arith.constant 0 : index
      %c0_35 = arith.constant 0 : index
      %63 = vector.load %arg9[%c0_34, %c0_35] : memref<16x32xbf16, #tpu.memory_space<vmem>>, vector<16x32xbf16>
      tpu.vector_store %arg9[%c0_34, %c0_35], %62 {strides = array<i32>} : memref<16x32xbf16, #tpu.memory_space<vmem>>, vector<16x32xbf16>,
    } else {
    }
    return
  }
  func.func @transform_0(%arg0: i32, %arg1: i32) -> (i32, i32) {
    %c0_i32 = arith.constant 0 : i32
    %c0_i32_0 = arith.constant 0 : i32
    return %arg0, %c0_i32 : i32, i32
  }
  func.func @transform_1(%arg0: i32, %arg1: i32) -> (i32, i32) {
    %c0_i32 = arith.constant 0 : i32
    %c0_i32_0 = arith.constant 0 : i32
    return %c0_i32, %arg1 : i32, i32
  }
  func.func @transform_2(%arg0: i32, %arg1: i32) -> (i32, i32) {
    %c0_i32 = arith.constant 0 : i32
    %c0_i32_0 = arith.constant 0 : i32
    return %c0_i32, %arg1 : i32, i32
  }
  func.func @transform_3(%arg0: i32, %arg1: i32) -> (i32, i32) {
    %c0_i32 = arith.constant 0 : i32
    %c0_i32_0 = arith.constant 0 : i32
    return %arg1, %c0_i32 : i32, i32
  }
  func.func @transform_4(%arg0: i32, %arg1: i32) -> (i32, i32) {
    %c0_i32 = arith.constant 0 : i32
    %c0_i32_0 = arith.constant 0 : i32
    %c0_i32_1 = arith.constant 0 : i32
    return %c0_i32, %c0_i32_0 : i32, i32
  }
  func.func @transform_5(%arg0: i32, %arg1: i32) -> (i32, i32) {
    %c0_i32 = arith.constant 0 : i32
    %c0_i32_0 = arith.constant 0 : i32
    %c0_i32_1 = arith.constant 0 : i32
    return %c0_i32, %c0_i32_0 : i32, i32
  }
  func.func @transform_6(%arg0: i32, %arg1: i32) -> (i32, i32) {
    %c0_i32 = arith.constant 0 : i32
    %c0_i32_0 = arith.constant 0 : i32
    %c0_i32_1 = arith.constant 0 : i32
    return %c0_i32, %c0_i32_0 : i32, i32
  }
  func.func @transform_7(%arg0: i32, %arg1: i32) -> (i32, i32) {
    %c0_i32 = arith.constant 0 : i32
    %c0_i32_0 = arith.constant 0 : i32
    return %arg0, %c0_i32 : i32, i32
  }
}

module attributes {stable_mosaic.version = 11 : i64} {
  func.func @_dense_kernel(%arg0: i32, %arg1: i32, %arg2: i32, %arg3: memref<16x32xbf16, #tpu.memory_space<vmem>>, %arg4: memref<32x256xbf16, #tpu.memory_space<vmem>>, %arg5: memref<1x256xf32, #tpu.memory_space<vmem>>, %arg6: memref<16x256xf32, #tpu.memory_space<vmem>>, %arg7: memref<16x256xf32, #tpu.memory_space<vmem>>) attributes {dimension_semantics = [#tpu.dimension_semantics<parallel>, #tpu.dimension_semantics<parallel>, #tpu.dimension_semantics<arbitrary>], iteration_bounds = array<i64: 1, 1, 1>, scalar_prefetch = 0 : i64, scratch_operands = 1 : i64, tpu.core_type = #tpu.core_type<tc>, window_params = [{transform_indices = @transform_0, window_bounds = array<i64: 16, 32>}, {transform_indices = @transform_1, window_bounds = array<i64: 32, 256>}, {transform_indices = @transform_2, window_bounds = array<i64: 1, 256>}, {transform_indices = @transform_3, window_bounds = array<i64: 16, 256>}]} {
    %c0_i32 = arith.constant 0 : i32
    %0 = arith.cmpi eq, %arg2, %c0_i32 : i32
    %1 = arith.extui %0 : i1 to i32
    %c0_i32_0 = arith.constant 0 : i32
    %2 = arith.cmpi ne, %1, %c0_i32_0 : i32
    scf.if %2 {
      %cst_10 = arith.constant 0.000000e+00 : f32
      %12 = vector.broadcast %cst_10 : f32 to vector<16x256xf32>
      %c0_11 = arith.constant 0 : index
      %c0_12 = arith.constant 0 : index
      %13 = vector.load %arg7[%c0_11, %c0_12] : memref<16x256xf32, #tpu.memory_space<vmem>>, vector<16x256xf32>
      tpu.vector_store %arg7[%c0_11, %c0_12], %12 {strides = array<i32>} : memref<16x256xf32, #tpu.memory_space<vmem>>, vector<16x256xf32>,
    } else {
    }
    %c0 = arith.constant 0 : index
    %c0_1 = arith.constant 0 : index
    %3 = vector.load %arg7[%c0, %c0_1] : memref<16x256xf32, #tpu.memory_space<vmem>>, vector<16x256xf32>
    %c0_2 = arith.constant 0 : index
    %c0_3 = arith.constant 0 : index
    %4 = vector.load %arg3[%c0_2, %c0_3] : memref<16x32xbf16, #tpu.memory_space<vmem>>, vector<16x32xbf16>
    %c0_4 = arith.constant 0 : index
    %c0_5 = arith.constant 0 : index
    %5 = vector.load %arg4[%c0_4, %c0_5] : memref<32x256xbf16, #tpu.memory_space<vmem>>, vector<32x256xbf16>
    %cst = arith.constant dense<0.000000e+00> : vector<16x256xf32>
    %6 = tpu.matmul %4, %5, %cst {dimension_numbers = #tpu.dot_dimension_numbers<[1], [0], [0], [1], [0, 0, 1, 1], [], []>} : vector<16x32xbf16>, vector<32x256xbf16>, vector<16x256xf32> -> vector<16x256xf32>
    %7 = arith.addf %3, %6 : vector<16x256xf32>
    %c0_6 = arith.constant 0 : index
    %c0_7 = arith.constant 0 : index
    %8 = vector.load %arg7[%c0_6, %c0_7] : memref<16x256xf32, #tpu.memory_space<vmem>>, vector<16x256xf32>
    tpu.vector_store %arg7[%c0_6, %c0_7], %7 {strides = array<i32>} : memref<16x256xf32, #tpu.memory_space<vmem>>, vector<16x256xf32>,
    %c0_i32_8 = arith.constant 0 : i32
    %9 = arith.cmpi eq, %arg2, %c0_i32_8 : i32
    %10 = arith.extui %9 : i1 to i32
    %c0_i32_9 = arith.constant 0 : i32
    %11 = arith.cmpi ne, %10, %c0_i32_9 : i32
    scf.if %11 {
      %c0_10 = arith.constant 0 : index
      %c0_11 = arith.constant 0 : index
      %12 = vector.load %arg7[%c0_10, %c0_11] : memref<16x256xf32, #tpu.memory_space<vmem>>, vector<16x256xf32>
      %c0_12 = arith.constant 0 : index
      %c0_13 = arith.constant 0 : index
      %13 = vector.load %arg5[%c0_12, %c0_13] : memref<1x256xf32, #tpu.memory_space<vmem>>, vector<1x256xf32>
      %14 = vector.broadcast %13 : vector<1x256xf32> to vector<16x256xf32>
      %15 = arith.addf %12, %14 : vector<16x256xf32>
      %c0_14 = arith.constant 0 : index
      %c0_15 = arith.constant 0 : index
      %16 = vector.load %arg6[%c0_14, %c0_15] : memref<16x256xf32, #tpu.memory_space<vmem>>, vector<16x256xf32>
      tpu.vector_store %arg6[%c0_14, %c0_15], %15 {strides = array<i32>} : memref<16x256xf32, #tpu.memory_space<vmem>>, vector<16x256xf32>,
    } else {
    }
    return
  }
  func.func @transform_0(%arg0: i32, %arg1: i32, %arg2: i32) -> (i32, i32) {
    %c0_i32 = arith.constant 0 : i32
    return %arg0, %arg2 : i32, i32
  }
  func.func @transform_1(%arg0: i32, %arg1: i32, %arg2: i32) -> (i32, i32) {
    %c0_i32 = arith.constant 0 : i32
    return %arg2, %arg1 : i32, i32
  }
  func.func @transform_2(%arg0: i32, %arg1: i32, %arg2: i32) -> (i32, i32) {
    %c0_i32 = arith.constant 0 : i32
    %c0_i32_0 = arith.constant 0 : i32
    return %c0_i32, %arg1 : i32, i32
  }
  func.func @transform_3(%arg0: i32, %arg1: i32, %arg2: i32) -> (i32, i32) {
    %c0_i32 = arith.constant 0 : i32
    return %arg0, %arg1 : i32, i32
  }
}

</mosaic_0001>

<llo_original>
// kernel: run.11
$region0: #{run.11}
  #allocation0 [shape = 'u32[]', space=smem, size = 0x4, offset = 0x4, fixed_abs, tag = 'smem constant byte address 0x4 - core index']
  #allocation1 [shape = 'u32[144,128]{1,0:T(1,128)}', space=vmem, size = 0x12000, scoped, tag = 'internal scratch']
  %s0 = inlined_call_operand.vmem [shape: f32[16,32], index: 0, kind: input, shape index: {}]
  %s1 = inlined_call_operand.vmem [shape: f32[1,32], index: 1, kind: input, shape index: {}]
  %s2 = inlined_call_operand.vmem [shape: f32[1,32], index: 2, kind: input, shape index: {}]
  %s3 = inlined_call_operand.vmem [shape: bf16[16,32], index: 3, kind: output, shape index: {}]
  %s4 = sld [smem:[#allocation0]]
  $region22: #{run.11} parent=0
    _
  %s6 = ssub.s32 1, %s4
  %s7 = scalar_select 0, %s6, %s4
  // Predicated region
  $region2: #{run.11} parent=0 // pred_check
    _
  $region3: #{run.11} parent=0 // pred_check_branch
    %9 = sbr.rel (0) target = $region5
  $region4: #{run.11} parent=0 // pred_region
    _
  $region5: #{run.11} parent=0 // pred_fallthru
    _
  // Predicated region
  $region6: #{run.11} parent=0 // pred_check
    _
  $region7: #{run.11} parent=0 // pred_check_branch
    %11 = sbr.rel (0) target = $region9
  $region8: #{run.11} parent=0 // pred_region
    _
  $region9: #{run.11} parent=0 // pred_fallthru
    _
  // Predicated region
  $region10: #{run.11} parent=0 // pred_check
    _
  $region11: #{run.11} parent=0 // pred_check_branch
    %13 = sbr.rel (0) target = $region13
  $region12: #{run.11} parent=0 // pred_region
    _
  $region13: #{run.11} parent=0 // pred_fallthru
    _
  %v14 = vld [vmem:[%s0] sm:$0xff]
  %v15 = vld [vmem:[%s0 + $0x8] sm:$0xff]
  %vm16 = vcmask 261120
  %v17 = vsel %vm16, %v14, 0.0
  %18 = vadd.xlane.f32.xlu0 %v17
  %v19 = vpop.xlane.xlu0 %18
  %v20 = vsel %vm16, %v15, 0.0
  %21 = vadd.xlane.f32.xlu0 %v20
  %v22 = vpop.xlane.xlu0 %21
  %v23 = vrcp.pop 32.0
  %v24 = vmul.f32 %v19, %v23
  %v25 = vmul.f32 %v22, %v23
  %v26 = vsub.f32 %v14, %v24
  %v27 = vsub.f32 %v15, %v25
  %v28 = vmul.f32 %v26, %v26
  %v29 = vmul.f32 %v27, %v27
  %v30 = vsel %vm16, %v28, 0.0
  %31 = vadd.xlane.f32.xlu0 %v30
  %v32 = vpop.xlane.xlu0 %31
  %v33 = vsel %vm16, %v29, 0.0
  %34 = vadd.xlane.f32.xlu0 %v33
  %v35 = vpop.xlane.xlu0 %34
  %v36 = vmul.f32 %v32, %v23
  %v37 = vmul.f32 %v35, %v23
  %v38 = vadd.f32 %v36, 1e-12
  %v39 = vadd.f32 %v37, 1e-12
  %v40 = vrsqrt.pop %v38
  %v41 = vrsqrt.pop %v39
  %v42 = vmul.f32 %v26, %v40
  %v43 = vmul.f32 %v27, %v41
  %v44 = vld [vmem:[%s1] sm:$0x1]
  %v46 = vlaneseq
  %v47 = vshrl.u32 %v46, 7
  %v48 = vsub.s32 0, %v47
  %v49 = vrot.slane %v44, %v48
  %v51 = vmul.f32 %v42, %v49
  %v52 = vmul.f32 %v43, %v49
  %v53 = vld [vmem:[%s2] sm:$0x1]
  %v55 = vlaneseq
  %v56 = vshrl.u32 %v55, 7
  %v57 = vsub.s32 0, %v56
  %v58 = vrot.slane %v53, %v57
  %v60 = vadd.f32 %v51, %v58
  %v61 = vadd.f32 %v52, %v58
  %v62 = vpack.c.bf16 %v61, %v60
  %v64 = vunpack.c.l.b16 %v62
  %v65 = vunpack.c.h.b16 %v62
  %v66 = vpack.c.b16 %v64, %v64
  %v67 = vpack.c.b16 %v65, %v65
  %vm70 = vcmask 257024
  %71 = vst.msk [vmem:[%s3] sm:$0xf] %vm70, %v66
  %72 = vst.msk [vmem:[%s3 + $0x4] sm:$0xf] %vm70, %v67
  // Predicated region
  $region14: #{run.11} parent=0 // pred_check
    _
  $region15: #{run.11} parent=0 // pred_check_branch
    %74 = sbr.rel (0) target = $region17
  $region16: #{run.11} parent=0 // pred_region
    _
  $region17: #{run.11} parent=0 // pred_fallthru
    _
  // Predicated region
  $region18: #{run.11} parent=0 // pred_check
    _
  $region19: #{run.11} parent=0 // pred_check_branch
    %76 = sbr.rel (0) target = $region21
  $region20: #{run.11} parent=0 // pred_region
    _
  $region21: #{run.11} parent=0 // pred_fallthru
    _

// kernel: run.12
$region0: #{run.12}
  #allocation0 [shape = 'u32[]', space=smem, size = 0x4, offset = 0x4, fixed_abs, tag = 'smem constant byte address 0x4 - core index']
  #allocation1 [shape = 'u32[144,128]{1,0:T(1,128)}', space=vmem, size = 0x12000, scoped, tag = 'internal scratch']
  #allocation2 [shape = 'f32[16,96]{1,0:T(8,128)}', space=vmem, size = 0x2000, scoped, tag = 'scratch operand']
  %s0 = inlined_call_operand.vmem [shape: bf16[16,32], index: 0, kind: input, shape index: {}]
  %s1 = inlined_call_operand.vmem [shape: bf16[32,96], index: 1, kind: input, shape index: {}]
  %s2 = inlined_call_operand.vmem [shape: f32[1,96], index: 2, kind: input, shape index: {}]
  %s3 = inlined_call_operand.vmem [shape: bf16[16,96], index: 3, kind: output, shape index: {}]
  %s4 = sld [smem:[#allocation0]]
  $region30: #{run.12} parent=0
    _
  %s6 = ssub.s32 1, %s4
  %s7 = scalar_select 0, %s6, %s4
  // Predicated region
  $region2: #{run.12} parent=0 // pred_check
    _
  $region3: #{run.12} parent=0 // pred_check_branch
    %9 = sbr.rel (0) target = $region5
  $region4: #{run.12} parent=0 // pred_region
    _
  $region5: #{run.12} parent=0 // pred_fallthru
    _
  // Predicated region
  $region6: #{run.12} parent=0 // pred_check
    _
  $region7: #{run.12} parent=0 // pred_check_branch
    %11 = sbr.rel (0) target = $region9
  $region8: #{run.12} parent=0 // pred_region
    _
  $region9: #{run.12} parent=0 // pred_fallthru
    _
  // Predicated region
  $region10: #{run.12} parent=0 // pred_check
    _
  $region11: #{run.12} parent=0 // pred_check_branch
    %13 = sbr.rel (0) target = $region13
  $region12: #{run.12} parent=0 // pred_region
    _
  $region13: #{run.12} parent=0 // pred_fallthru
    _
  %p15 = scmp.eq.s32.totalorder 0, 0
  // Predicated region
  $region14: #{run.12} parent=0 // pred_check
    %p16 = pneg %p15
  $region15: #{run.12} parent=0 // pred_check_branch
    %18 = sbr.rel (%p16) target = $region17
  $region16: #{run.12} parent=0 // pred_region
    %vm19 = vcmask 785408
    %20 = vst.msk [vmem:[#allocation2] sm:$0xff] %vm19, 0.0
    %21 = vst.msk [vmem:[#allocation2 + $0x8] sm:$0xff] %vm19, 0.0
  $region17: #{run.12} parent=0 // pred_fallthru
    _
  %v22 = vld [vmem:[#allocation2] sm:$0xff]
  %v23 = vld [vmem:[#allocation2 + $0x8] sm:$0xff]
  %v24 = vld [vmem:[%s0] sm:$0xf]
  %v25 = vld [vmem:[%s0 + $0x4] sm:$0xf]
  %v26 = vld [vmem:[%s1] sm:$0xf]
  %v27 = vld [vmem:[%s1 + $0x4] sm:$0xf]
  %v28 = vld [vmem:[%s1 + $0x8] sm:$0xf]
  %v29 = vld [vmem:[%s1 + $0xc] sm:$0xf]
  %v32 = vunpack.c.l.b16 %v24
  %v33 = vunpack.c.l.b16 %v25
  %v34 = vpack.c.b16 %v33, %v32
  %v39 = vunpack.c.l.b16 %v26
  %v40 = vunpack.c.l.b16 %v27
  %v41 = vunpack.c.l.b16 %v28
  %v42 = vunpack.c.l.b16 %v29
  %v43 = vpack.c.b16 %v40, %v39
  %v44 = vpack.c.b16 %v42, %v41
  %vm47 = vcmask 261120
  %v49 = vsel %vm47, %v34, 0
  %51 = vmatprep.subr.bf16.mxu0 0
  %52 = vmatpush1.bf16.msra.mxu0 %v43
  %53 = vmatprep.subr.bf16.mxu0 0
  %54 = vmatpush1.bf16.msra.mxu0 %v44
  %55 = vmatprep.subr.bf16.mxu0 0
  %56 = vmatpush1.bf16.msra.mxu0 0
  %57 = vmatprep.subr.bf16.mxu0 0
  %58 = vmatpush1.bf16.msra.mxu0 0
  %59 = vmatprep.subr.bf16.mxu0 0
  %60 = vmatpush1.bf16.msra.mxu0 0
  %61 = vmatprep.subr.bf16.mxu0 0
  %62 = vmatpush1.bf16.msra.mxu0 0
  %63 = vmatprep.subr.bf16.mxu0 0
  %64 = vmatpush1.bf16.msra.mxu0 0
  %65 = vmatprep.subr.bf16.mxu0 0
  %66 = vmatpush1.bf16.msra.mxu0 0
  %67 = vmatprep.subr.bf16.mxu0 0
  %68 = vmatpush1.bf16.msra.mxu0 0
  %69 = vmatprep.subr.bf16.mxu0 0
  %70 = vmatpush1.bf16.msra.mxu0 0
  %71 = vmatprep.subr.bf16.mxu0 0
  %72 = vmatpush1.bf16.msra.mxu0 0
  %73 = vmatprep.subr.bf16.mxu0 0
  %74 = vmatpush1.bf16.msra.mxu0 0
  %75 = vmatprep.subr.bf16.mxu0 0
  %76 = vmatpush1.bf16.msra.mxu0 0
  %77 = vmatprep.subr.bf16.mxu0 0
  %78 = vmatpush1.bf16.msra.mxu0 0
  %79 = vmatprep.subr.bf16.mxu0 0
  %80 = vmatpush1.bf16.msra.mxu0 0
  %81 = vmatprep.subr.bf16.mxu0 0
  %82 = vmatpush1.bf16.msra.mxu0 0
  %83 = vmatprep.mubr.bf16.mxu0 0
  %84 = vmatmul.mubr.bf16.gmra.mrb[0].mxu0 %v49
  %v85 = vpop.f32.mrb[0].mxu0
  %v86 = vadd.f32 0.0, %v85
  %v87 = vpop.f32.mrb[0].mxu0
  %v88 = vpop.f32.mrb[0].mxu0
  %v89 = vadd.f32 0.0, %v88
  %v90 = vpop.f32.mrb[0].mxu0
  %91 = vdwg.mxu0
  %v92 = vadd.f32 %v22, %v86
  %v93 = vadd.f32 %v23, %v89
  %vm94 = vcmask 785408
  %95 = vst.msk [vmem:[#allocation2] sm:$0xff] %vm94, %v92
  %96 = vst.msk [vmem:[#allocation2 + $0x8] sm:$0xff] %vm94, %v93
  // Predicated region
  $region18: #{run.12} parent=0 // pred_check
    %p97 = pneg %p15
  $region19: #{run.12} parent=0 // pred_check_branch
    %99 = sbr.rel (%p97) target = $region21
  $region20: #{run.12} parent=0 // pred_region
    %v100 = vld [vmem:[#allocation2] sm:$0xff]
    %v101 = vld [vmem:[#allocation2 + $0x8] sm:$0xff]
    %v102 = vld [vmem:[%s2] sm:$0x1]
    %v104 = vlaneseq
    %v105 = vshrl.u32 %v104, 7
    %v106 = vsub.s32 0, %v105
    %v107 = vrot.slane %v102, %v106
    %v109 = vadd.f32 %v100, %v107
    %v110 = vadd.f32 %v101, %v107
    %v111 = vpack.c.bf16 %v110, %v109
    %v113 = vunpack.c.l.b16 %v111
    %v114 = vunpack.c.h.b16 %v111
    %v115 = vpack.c.b16 %v113, %v113
    %v116 = vpack.c.b16 %v114, %v114
    %vm119 = vcmask 781312
    %120 = vst.msk [vmem:[%s3] sm:$0xf] %vm119, %v115
    %121 = vst.msk [vmem:[%s3 + $0x4] sm:$0xf] %vm119, %v116
  $region21: #{run.12} parent=0 // pred_fallthru
    _
  // Predicated region
  $region22: #{run.12} parent=0 // pred_check
    _
  $region23: #{run.12} parent=0 // pred_check_branch
    %123 = sbr.rel (0) target = $region25
  $region24: #{run.12} parent=0 // pred_region
    _
  $region25: #{run.12} parent=0 // pred_fallthru
    _
  // Predicated region
  $region26: #{run.12} parent=0 // pred_check
    _
  $region27: #{run.12} parent=0 // pred_check_branch
    %125 = sbr.rel (0) target = $region29
  $region28: #{run.12} parent=0 // pred_region
    _
  $region29: #{run.12} parent=0 // pred_fallthru
    _

// kernel: run.13
$region0: #{run.13}
  #allocation0 [shape = 'u32[]', space=smem, size = 0x4, offset = 0x4, fixed_abs, tag = 'smem constant byte address 0x4 - core index']
  #allocation1 [shape = 'u32[144,128]{1,0:T(1,128)}', space=vmem, size = 0x12000, scoped, tag = 'internal scratch']
  %s0 = inlined_call_operand.vmem [shape: bf16[3,2,2,8,16], index: 0, kind: input, shape index: {}]
  %s1 = inlined_call_operand.vmem [shape: f32[2,1,8], index: 1, kind: input, shape index: {}]
  %s2 = inlined_call_operand.vmem [shape: bf16[2,2,8,16], index: 2, kind: output, shape index: {}]
  %s3 = sld [smem:[#allocation0]]
  $region82: #{run.13} parent=0
    _
  %s5 = ssub.s32 1, %s3
  %s6 = scalar_select 0, %s5, %s3
  $region1: #{run.13} parent=0
    #allocation2 [shape = 'u8[12288]{0}', space=vmem, size = 0x3000, scoped, tag = 'input window, operand 0']
    loop: start=0, step=1, limit=6
    $region2: #{run.13} parent=1 // loop_pre_header
      _
    $region3: #{run.13} parent=1 // loop_header
      %s8 = sphi 0, %s12
      %p9 = scmp.ge.s32.totalorder %s8, 6
      %s15 = sphi 0, %s27
      %s16 = sphi 0, %s23
      %s17 = sphi 0, %s15
      %s18 = sphi 0, %s16
      %s19 = sphi 0, %s17
      %s20 = sphi 0, %s18
      %s32 = sphi 0, %s34
      %s35 = sphi 0, %s32
      %s36 = sphi 0, %s35
      %s52 = sphi 0, %s36
      %s58 = sphi 0, %s60
      %s61 = sphi 0, %s58
      %s62 = sphi 0, %s61
      %s78 = sphi 0, %s62
      %s86 = sphi 0, %s88
      %s89 = sphi 0, %s86
      %s90 = sphi 0, %s89
      %s106 = sphi 0, %s90
    $region4: #{run.13} parent=1 // loop_header_branch
      %11 = sbr.rel (%p9) target = $region8
    $region5: #{run.13} parent=1 // loop_body
      %s13 = ssub.s32 %s8, 1
      %s14 = ssub.s32 %s8, 2
      %s21 = sadd.s32 1, %s16
      %p22 = scmp.ge.s32.totalorder %s21, 2
      %s23 = scalar_select %p22, 0, %s21
      %s24 = sadd.s32 1, %s15
      %s25 = scalar_select %p22, %s24, %s15
      %p26 = scmp.ge.s32.totalorder %s25, 2
      %s27 = scalar_select %p26, 0, %s25
      %s28 = ssub.s32 %s15, %s27
      %s29 = ssub.s32 %s16, %s23
      %s30 = sor.u32 %s28, %s29
      %p31 = scmp.eq.s32.totalorder %s30, 0
      %s33 = sadd.s32 %s32, 1
      %s34 = scalar_select %p31, %s32, %s33
      %p37 = pneg %p31
      %p38 = scmp.eq.s32.totalorder %s8, 3
      %p39 = por %p37, %p38
      %p40 = scmp.ne.s32.totalorder %s32, %s35
      %p41 = scmp.eq.s32.totalorder %s8, 0
      %p42 = por %p40, %p41
      %p43 = scmp.ne.s32.totalorder %s32, %s35
      %p44 = scmp.eq.s32.totalorder %s13, 3
      %p45 = por %p43, %p44
      %p46 = scmp.ne.s32.totalorder %s35, %s36
      %p47 = scmp.eq.s32.totalorder %s13, 0
      %p48 = por %p46, %p47
      %p49 = scmp.ne.s32.totalorder %s35, %s36
      %p50 = scmp.eq.s32.totalorder %s14, 3
      %p51 = por %p49, %p50
      %p53 = scmp.ne.s32.totalorder %s36, %s52
      %p54 = scmp.eq.s32.totalorder %s14, 0
      %p55 = por %p53, %p54
      %s56 = ssub.s32 %s15, %s27
      %p57 = scmp.eq.s32.totalorder %s56, 0
      %s59 = sadd.s32 %s58, 1
      %s60 = scalar_select %p57, %s58, %s59
      %p63 = pneg %p57
      %p64 = scmp.eq.s32.totalorder %s8, 3
      %p65 = por %p63, %p64
      %p66 = scmp.ne.s32.totalorder %s58, %s61
      %p67 = scmp.eq.s32.totalorder %s8, 0
      %p68 = por %p66, %p67
      %p69 = scmp.ne.s32.totalorder %s58, %s61
      %p70 = scmp.eq.s32.totalorder %s13, 3
      %p71 = por %p69, %p70
      %p72 = scmp.ne.s32.totalorder %s61, %s62
      %p73 = scmp.eq.s32.totalorder %s13, 0
      %p74 = por %p72, %p73
      %p75 = scmp.ne.s32.totalorder %s61, %s62
      %p76 = scmp.eq.s32.totalorder %s14, 3
      %p77 = por %p75, %p76
      %p79 = scmp.ne.s32.totalorder %s62, %s78
      %p80 = scmp.eq.s32.totalorder %s14, 0
      %p81 = por %p79, %p80
      %s82 = ssub.s32 %s15, %s27
      %s83 = ssub.s32 %s16, %s23
      %s84 = sor.u32 %s82, %s83
      %p85 = scmp.eq.s32.totalorder %s84, 0
      %s87 = sadd.s32 %s86, 1
      %s88 = scalar_select %p85, %s86, %s87
      %p91 = pneg %p85
      %p92 = scmp.eq.s32.totalorder %s8, 3
      %p93 = por %p91, %p92
      %p94 = scmp.ne.s32.totalorder %s86, %s89
      %p95 = scmp.eq.s32.totalorder %s8, 0
      %p96 = por %p94, %p95
      %p97 = scmp.ne.s32.totalorder %s86, %s89
      %p98 = scmp.eq.s32.totalorder %s13, 3
      %p99 = por %p97, %p98
      %p100 = scmp.ne.s32.totalorder %s89, %s90
      %p101 = scmp.eq.s32.totalorder %s13, 0
      %p102 = por %p100, %p101
      %p103 = scmp.ne.s32.totalorder %s89, %s90
      %p104 = scmp.eq.s32.totalorder %s14, 3
      %p105 = por %p103, %p104
      %p107 = scmp.ne.s32.totalorder %s90, %s106
      %p108 = scmp.eq.s32.totalorder %s14, 0
      %p109 = por %p107, %p108
      %p110 = scmp.le.s32.totalorder 1, %s8
      %p111 = scmp.lt.s32.totalorder %s8, 5
      %p112 = pnand %p110, %p111
      %p113 = pneg %p112
      // Predicated region
      $region9: #{run.13} parent=5 // pred_check
        _
      $region10: #{run.13} parent=5 // pred_check_branch
        %115 = sbr.rel (%p112) target = $region12
      $region11: #{run.13} parent=5 // pred_region
        %s116 = ssub.s32 %s8, 1
      $region12: #{run.13} parent=5 // pred_fallthru
        _
      %p117 = scmp.lt.s32.totalorder %s8, 4
      // Predicated region
      $region13: #{run.13} parent=5 // pred_check
        %p118 = pneg %p117
      $region14: #{run.13} parent=5 // pred_check_branch
        %120 = sbr.rel (%p118) target = $region16
      $region15: #{run.13} parent=5 // pred_region
        // Predicated region
        $region17: #{run.13} parent=15 // pred_check
          %p121 = pneg %p42
        $region18: #{run.13} parent=15 // pred_check_branch
          %123 = sbr.rel (%p121) target = $region20
        $region19: #{run.13} parent=15 // pred_region
          %s124 = sand.u32 %s32, 1
          %s125 = sand.u32 %s32, 1
          %s126 = smul.addr %s125, 12
          %s127 = scalar_lea.vmem [#allocation2], %s126
          %s128 = smul.addr %s15, 2
          %s129 = sadd.s32 %s16, %s128
          %s130 = smul.addr %s129, 4
          %s131 = scalar_lea.vmem %s0, %s130
          // Predicated region
          $region21: #{run.13} parent=19 // pred_check
            _
          $region22: #{run.13} parent=19 // pred_check_branch
            %133 = sbr.rel (0) target = $region24
          $region23: #{run.13} parent=19 // pred_region
            // Predicated region
            $region25: #{run.13} parent=23 // pred_check
              _
            $region26: #{run.13} parent=23 // pred_check_branch
              %135 = sbr.rel target = $region28
            $region27: #{run.13} parent=23 // pred_region
              // Predicated region
              $region40: #{run.13} parent=27 // pred_check
                _
              $region41: #{run.13} parent=27 // pred_check_branch
                %154 = sbr.rel (0) target = $region43
              $region42: #{run.13} parent=27 // pred_region
                loop: start=0, step=1, limit=1
                $region44: #{run.13} parent=42 // loop_pre_header
                  _
                $region45: #{run.13} parent=42 // loop_header
                  %s156 = sphi 0, %s160
                  %p157 = scmp.ge.s32.totalorder %s156, 1
                  %s161 = sphi %s131, %s131
                  %s162 = sphi %s127, %s127
                $region46: #{run.13} parent=42 // loop_header_branch
                  %159 = sbr.rel (%p157) target = $region50
                $region47: #{run.13} parent=42 // loop_body
                  _
                $region48: #{run.13} parent=42 // loop_footer
                  %s160 = sadd.s32 1, %s156
                $region49: #{run.13} parent=42 // loop_footer_branch
                  %155 = sbr.rel target = $region45
                $region50: #{run.13} parent=42 // loop_exit
                  _
                loop: start=0, step=1, limit=1
                $region51: #{run.13} parent=42 // loop_pre_header
                  _
                $region52: #{run.13} parent=42 // loop_header
                  %s165 = sphi 0, %s169
                  %p166 = scmp.ge.s32.totalorder %s165, 1
                  %s170 = sphi %s131, %s131
                  %s171 = sphi %s127, %s127
                $region53: #{run.13} parent=42 // loop_header_branch
                  %168 = sbr.rel (%p166) target = $region57
                $region54: #{run.13} parent=42 // loop_body
                  %v172 = vld [vmem:[%s170] sm:$0xf]
                  %173 = vst [vmem:[%s171] sm:$0xf] %v172
                  %v174 = vld [vmem:[%s170 + $0x10] sm:$0xf]
                  %175 = vst [vmem:[%s171 + $0x4] sm:$0xf] %v174
                  %v176 = vld [vmem:[%s170 + $0x20] sm:$0xf]
                  %177 = vst [vmem:[%s171 + $0x8] sm:$0xf] %v176
                $region55: #{run.13} parent=42 // loop_footer
                  %s169 = sadd.s32 1, %s165
                $region56: #{run.13} parent=42 // loop_footer_branch
                  %164 = sbr.rel target = $region52
                $region57: #{run.13} parent=42 // loop_exit
                  _
              $region43: #{run.13} parent=27 // pred_fallthru
                _
            $region28: #{run.13} parent=23 // pred_fallthru
              _
            // Predicated region
            $region29: #{run.13} parent=23 // pred_check
              _
            $region30: #{run.13} parent=23 // pred_check_branch
              %137 = sbr.rel (0) target = $region32
            $region31: #{run.13} parent=23 // pred_region
              loop: start=0, step=1, limit=1
              $region33: #{run.13} parent=31 // loop_pre_header
                _
              $region34: #{run.13} parent=31 // loop_header
                %s140 = sphi 0, %s144
                %p141 = scmp.ge.s32.totalorder %s140, 1
                %s145 = sphi %s131, %s131
                %s146 = sphi %s127, %s127
              $region35: #{run.13} parent=31 // loop_header_branch
                %143 = sbr.rel (%p141) target = $region39
              $region36: #{run.13} parent=31 // loop_body
                %v147 = vld [vmem:[%s145] sm:$0xf]
                %148 = vst [vmem:[%s146] sm:$0xf] %v147
                %v149 = vld [vmem:[%s145 + $0x10] sm:$0xf]
                %150 = vst [vmem:[%s146 + $0x4] sm:$0xf] %v149
                %v151 = vld [vmem:[%s145 + $0x20] sm:$0xf]
                %152 = vst [vmem:[%s146 + $0x8] sm:$0xf] %v151
              $region37: #{run.13} parent=31 // loop_footer
                %s144 = sadd.s32 1, %s140
              $region38: #{run.13} parent=31 // loop_footer_branch
                %139 = sbr.rel target = $region34
              $region39: #{run.13} parent=31 // loop_exit
                _
            $region32: #{run.13} parent=23 // pred_fallthru
              _
          $region24: #{run.13} parent=19 // pred_fallthru
            _
          %178 = vnop
        $region20: #{run.13} parent=15 // pred_fallthru
          _
        // Predicated region
        $region58: #{run.13} parent=15 // pred_check
          %p179 = pneg %p68
        $region59: #{run.13} parent=15 // pred_check_branch
          %181 = sbr.rel (%p179) target = $region61
        $region60: #{run.13} parent=15 // pred_region
          %p182 = scmp.lt.s32.totalorder %s15, 1
          %s183 = scalar_select %p182, %s15, 1
          %s184 = scalar_lea.vmem %s1, %s183
        $region61: #{run.13} parent=15 // pred_fallthru
          _
      $region16: #{run.13} parent=5 // pred_fallthru
        _
      %p185 = scmp.le.s32.totalorder 1, %s8
      %p186 = scmp.lt.s32.totalorder %s8, 5
      %p187 = pnand %p185, %p186
      %p188 = pneg %p187
      // Predicated region
      $region62: #{run.13} parent=5 // pred_check
        _
      $region63: #{run.13} parent=5 // pred_check_branch
        %190 = sbr.rel (%p187) target = $region65
      $region64: #{run.13} parent=5 // pred_region
        %s191 = ssub.s32 %s8, 1
        %s192 = sand.u32 %s35, 1
        %s193 = sand.u32 %s35, 1
        %s194 = smul.addr %s193, 12
        %s195 = scalar_lea.vmem [#allocation2], %s194
        // Predicated region
        $region66: #{run.13} parent=64 // pred_check
          %p196 = pneg %p48
        $region67: #{run.13} parent=64 // pred_check_branch
          %198 = sbr.rel (%p196) target = $region69
        $region68: #{run.13} parent=64 // pred_region
          _
        $region69: #{run.13} parent=64 // pred_fallthru
          _
        %s199 = sand.u32 %s35, 1
        %s200 = sand.u32 %s35, 1
        %s201 = smul.addr %s200, 12
        %s202 = scalar_lea.vmem [#allocation2], %s201
        %p203 = pneg %p48
        %p204 = pneg %p45
        %p205 = scmp.lt.s32.totalorder %s17, 1
        %s206 = scalar_select %p205, %s17, 1
        %s207 = scalar_lea.vmem %s1, %s206
        %p208 = pneg %p74
        %p209 = pneg %p71
        %p210 = pneg %p102
        %p211 = pneg %p99
        %p212 = scmp.lt.s32.totalorder %s17, 1
        %s213 = scalar_select %p212, %s17, 1
        %p214 = scmp.lt.s32.totalorder %s18, 1
        %s215 = scalar_select %p214, %s18, 1
        %s216 = smul.addr %s213, 2
        %s217 = sadd.s32 %s215, %s216
        %s218 = smul.addr %s217, 4
        %s219 = scalar_lea.vmem %s2, %s218
        %p220 = scmp.lt.s32.totalorder %s17, 1
        %s221 = scalar_select %p220, %s17, 1
        %s222 = scalar_lea.vmem %s1, %s221
        %p223 = scmp.lt.s32.totalorder %s17, 1
        %s224 = scalar_select %p223, %s17, 1
        %p225 = scmp.lt.s32.totalorder %s18, 1
        %s226 = scalar_select %p225, %s18, 1
        %s227 = smul.addr %s224, 2
        %s228 = sadd.s32 %s226, %s227
        %s229 = smul.addr %s228, 4
        %s230 = scalar_lea.vmem %s2, %s229
        %v232 = vld [vmem:[%s195] sm:$0xf]
        %v233 = vunpack.c.l.bf16 %v232
        %v234 = vmul.f32 %v233, 0.25
        %v235 = vpack.c.bf16 %v234, %v234
        %s236 = scalar_lea.vmem %s195, 4 [#allocation2]
        %v237 = vld [vmem:[%s236] sm:$0xf]
        %s238 = scalar_lea.vmem %s195, 8 [#allocation2]
        %v239 = vld [vmem:[%s238] sm:$0xf]
        %v240 = vld [vmem:[%s222] sm:$0x1]
        %v242 = vlaneseq
        %v243 = vshrl.u32 %v242, 7
        %v244 = vsub.s32 0, %v243
        %v245 = vrot.slane %v240, %v244
        %vm247 = vcmask 130048
        %v249 = vsel %vm247, %v235, 0
        %v252 = vsel %vm247, %v237, 0
        %254 = vmatprep.subr.bf16.mxu0 0
        %255 = vmatpush1.bf16.xpose.msra.mxu0 %v252
        %256 = vmatprep.subr.bf16.mxu0 0
        %257 = vmatpush1.bf16.xpose.msra.mxu0 0
        %258 = vmatprep.subr.bf16.mxu0 0
        %259 = vmatpush1.bf16.xpose.msra.mxu0 0
        %260 = vmatprep.subr.bf16.mxu0 0
        %261 = vmatpush1.bf16.xpose.msra.mxu0 0
        %262 = vmatprep.subr.bf16.mxu0 0
        %263 = vmatpush1.bf16.xpose.msra.mxu0 0
        %264 = vmatprep.subr.bf16.mxu0 0
        %265 = vmatpush1.bf16.xpose.msra.mxu0 0
        %266 = vmatprep.subr.bf16.mxu0 0
        %267 = vmatpush1.bf16.xpose.msra.mxu0 0
        %268 = vmatprep.subr.bf16.mxu0 0
        %269 = vmatpush1.bf16.xpose.msra.mxu0 0
        %270 = vmatprep.subr.bf16.mxu0 0
        %271 = vmatpush1.bf16.xpose.msra.mxu0 0
        %272 = vmatprep.subr.bf16.mxu0 0
        %273 = vmatpush1.bf16.xpose.msra.mxu0 0
        %274 = vmatprep.subr.bf16.mxu0 0
        %275 = vmatpush1.bf16.xpose.msra.mxu0 0
        %276 = vmatprep.subr.bf16.mxu0 0
        %277 = vmatpush1.bf16.xpose.msra.mxu0 0
        %278 = vmatprep.subr.bf16.mxu0 0
        %279 = vmatpush1.bf16.xpose.msra.mxu0 0
        %280 = vmatprep.subr.bf16.mxu0 0
        %281 = vmatpush1.bf16.xpose.msra.mxu0 0
        %282 = vmatprep.subr.bf16.mxu0 0
        %283 = vmatpush1.bf16.xpose.msra.mxu0 0
        %284 = vmatprep.subr.bf16.mxu0 0
        %285 = vmatpush1.bf16.xpose.msra.mxu0 0
        %286 = vmatprep.mubr.bf16.mxu0 0
        %287 = vmatmul.mubr.bf16.gmra.mrb[0].mxu0 %v249
        %v288 = vpop.f32.mrb[0].mxu0
        %v289 = vadd.f32 %v245, %v288
        %v290 = vpop.f32.mrb[0].mxu0
        %v291 = vpop.f32.mrb[0].mxu0
        %v292 = vpop.f32.mrb[0].mxu0
        %293 = vdwg.mxu0
        %vm294 = vcmask 64512
        %v295 = vsel %vm294, %v289, -inf
        %296 = vmax.xlane.f32.xlu0 %v295
        %v297 = vpop.xlane.xlu0 %296
        %v298 = vsub.f32 %v289, %v297
        %v299 = vmul.f32 %v298, 1.442695
        %v300 = vpow.pop %v299
        %v301 = vsel %vm294, %v300, 0.0
        %302 = vadd.xlane.f32.xlu0 %v301
        %v303 = vpop.xlane.xlu0 %302
        %v304 = vrcp.pop %v303
        %v305 = vmul.f32 %v300, %v304
        %v306 = vpack.c.bf16 %v305, %v305
        %v308 = vsel %vm294, %v306, 0
        %vm310 = vcmask 1043456
        %v312 = vsel %vm310, %v239, 0
        %314 = vmatprep.subr.bf16.mxu0 0
        %315 = vmatpush1.bf16.msra.mxu0 %v312
        %316 = vmatprep.subr.bf16.mxu0 0
        %317 = vmatpush1.bf16.msra.mxu0 0
        %318 = vmatprep.subr.bf16.mxu0 0
        %319 = vmatpush1.bf16.msra.mxu0 0
        %320 = vmatprep.subr.bf16.mxu0 0
        %321 = vmatpush1.bf16.msra.mxu0 0
        %322 = vmatprep.subr.bf16.mxu0 0
        %323 = vmatpush1.bf16.msra.mxu0 0
        %324 = vmatprep.subr.bf16.mxu0 0
        %325 = vmatpush1.bf16.msra.mxu0 0
        %326 = vmatprep.subr.bf16.mxu0 0
        %327 = vmatpush1.bf16.msra.mxu0 0
        %328 = vmatprep.subr.bf16.mxu0 0
        %329 = vmatpush1.bf16.msra.mxu0 0
        %330 = vmatprep.subr.bf16.mxu0 0
        %331 = vmatpush1.bf16.msra.mxu0 0
        %332 = vmatprep.subr.bf16.mxu0 0
        %333 = vmatpush1.bf16.msra.mxu0 0
        %334 = vmatprep.subr.bf16.mxu0 0
        %335 = vmatpush1.bf16.msra.mxu0 0
        %336 = vmatprep.subr.bf16.mxu0 0
        %337 = vmatpush1.bf16.msra.mxu0 0
        %338 = vmatprep.subr.bf16.mxu0 0
        %339 = vmatpush1.bf16.msra.mxu0 0
        %340 = vmatprep.subr.bf16.mxu0 0
        %341 = vmatpush1.bf16.msra.mxu0 0
        %342 = vmatprep.subr.bf16.mxu0 0
        %343 = vmatpush1.bf16.msra.mxu0 0
        %344 = vmatprep.subr.bf16.mxu0 0
        %345 = vmatpush1.bf16.msra.mxu0 0
        %346 = vmatprep.mubr.bf16.mxu0 0
        %347 = vmatmul.mubr.bf16.gmra.mrb[0].mxu0 %v308
        %v348 = vpop.f32.mrb[0].mxu0
        %v349 = vadd.f32 0.0, %v348
        %v350 = vpop.f32.mrb[0].mxu0
        %v351 = vpop.f32.mrb[0].mxu0
        %v352 = vpop.f32.mrb[0].mxu0
        %353 = vdwg.mxu0
        %v354 = vpack.c.bf16 %v349, %v349
        %vm355 = vcmask 125952
        %356 = vst.msk [vmem:[%s230] sm:$0xf] %vm355, %v354
        %p357 = scmp.lt.s32.totalorder %s17, 1
        %s358 = scalar_select %p357, %s17, 1
        %p359 = scmp.lt.s32.totalorder %s18, 1
        %s360 = scalar_select %p359, %s18, 1
        %s361 = smul.addr %s358, 2
        %s362 = sadd.s32 %s360, %s361
        %s363 = smul.addr %s362, 4
        %s364 = scalar_lea.vmem %s2, %s363
        // Predicated region
        $region70: #{run.13} parent=64 // pred_check
          %p365 = pneg %p99
        $region71: #{run.13} parent=64 // pred_check_branch
          %367 = sbr.rel (%p365) target = $region73
        $region72: #{run.13} parent=64 // pred_region
          _
        $region73: #{run.13} parent=64 // pred_fallthru
          _
      $region65: #{run.13} parent=5 // pred_fallthru
        _
      %p368 = scmp.le.s32.totalorder 2, %s8
      // Predicated region
      $region74: #{run.13} parent=5 // pred_check
        %p369 = pneg %p368
      $region75: #{run.13} parent=5 // pred_check_branch
        %371 = sbr.rel (%p369) target = $region77
      $region76: #{run.13} parent=5 // pred_region
        %s372 = ssub.s32 %s8, 2
        // Predicated region
        $region78: #{run.13} parent=76 // pred_check
          %p373 = pneg %p105
        $region79: #{run.13} parent=76 // pred_check_branch
          %375 = sbr.rel (%p373) target = $region81
        $region80: #{run.13} parent=76 // pred_region
          %p376 = scmp.lt.s32.totalorder %s19, 1
          %s377 = scalar_select %p376, %s19, 1
          %p378 = scmp.lt.s32.totalorder %s20, 1
          %s379 = scalar_select %p378, %s20, 1
          %s380 = smul.addr %s377, 2
          %s381 = sadd.s32 %s379, %s380
          %s382 = smul.addr %s381, 4
          %s383 = scalar_lea.vmem %s2, %s382
        $region81: #{run.13} parent=76 // pred_fallthru
          _
      $region77: #{run.13} parent=5 // pred_fallthru
        _
    $region6: #{run.13} parent=1 // loop_footer
      %s12 = sadd.s32 1, %s8
    $region7: #{run.13} parent=1 // loop_footer_branch
      %7 = sbr.rel target = $region3
    $region8: #{run.13} parent=1 // loop_exit
      _

// kernel: run.14
$region0: #{run.14}
  #allocation0 [shape = 'u32[]', space=smem, size = 0x4, offset = 0x4, fixed_abs, tag = 'smem constant byte address 0x4 - core index']
  #allocation1 [shape = 'u32[144,128]{1,0:T(1,128)}', space=vmem, size = 0x12000, scoped, tag = 'internal scratch']
  #allocation2 [shape = 'f32[16,32]{1,0:T(8,128)}', space=vmem, size = 0x2000, scoped, tag = 'scratch operand']
  %s0 = inlined_call_operand.vmem [shape: bf16[16,32], index: 0, kind: input, shape index: {}]
  %s1 = inlined_call_operand.vmem [shape: bf16[32,32], index: 1, kind: input, shape index: {}]
  %s2 = inlined_call_operand.vmem [shape: f32[1,32], index: 2, kind: input, shape index: {}]
  %s3 = inlined_call_operand.vmem [shape: bf16[16,32], index: 3, kind: input, shape index: {}]
  %s4 = inlined_call_operand.vmem [shape: f32[1,32], index: 4, kind: input, shape index: {}]
  %s5 = inlined_call_operand.vmem [shape: f32[1,32], index: 5, kind: input, shape index: {}]
  %s6 = inlined_call_operand.vmem [shape: bf16[16,32], index: 6, kind: output, shape index: {}]
  %s7 = sld [smem:[#allocation0]]
  $region42: #{run.14} parent=0
    _
  %s9 = ssub.s32 1, %s7
  %s10 = scalar_select 0, %s9, %s7
  // Predicated region
  $region2: #{run.14} parent=0 // pred_check
    _
  $region3: #{run.14} parent=0 // pred_check_branch
    %12 = sbr.rel (0) target = $region5
  $region4: #{run.14} parent=0 // pred_region
    _
  $region5: #{run.14} parent=0 // pred_fallthru
    _
  // Predicated region
  $region6: #{run.14} parent=0 // pred_check
    _
  $region7: #{run.14} parent=0 // pred_check_branch
    %14 = sbr.rel (0) target = $region9
  $region8: #{run.14} parent=0 // pred_region
    _
  $region9: #{run.14} parent=0 // pred_fallthru
    _
  // Predicated region
  $region10: #{run.14} parent=0 // pred_check
    _
  $region11: #{run.14} parent=0 // pred_check_branch
    %16 = sbr.rel (0) target = $region13
  $region12: #{run.14} parent=0 // pred_region
    _
  $region13: #{run.14} parent=0 // pred_fallthru
    _
  // Predicated region
  $region14: #{run.14} parent=0 // pred_check
    _
  $region15: #{run.14} parent=0 // pred_check_branch
    %18 = sbr.rel (0) target = $region17
  $region16: #{run.14} parent=0 // pred_region
    _
  $region17: #{run.14} parent=0 // pred_fallthru
    _
  // Predicated region
  $region18: #{run.14} parent=0 // pred_check
    _
  $region19: #{run.14} parent=0 // pred_check_branch
    %20 = sbr.rel (0) target = $region21
  $region20: #{run.14} parent=0 // pred_region
    _
  $region21: #{run.14} parent=0 // pred_fallthru
    _
  // Predicated region
  $region22: #{run.14} parent=0 // pred_check
    _
  $region23: #{run.14} parent=0 // pred_check_branch
    %22 = sbr.rel (0) target = $region25
  $region24: #{run.14} parent=0 // pred_region
    _
  $region25: #{run.14} parent=0 // pred_fallthru
    _
  %p24 = scmp.eq.s32.totalorder 0, 0
  // Predicated region
  $region26: #{run.14} parent=0 // pred_check
    %p25 = pneg %p24
  $region27: #{run.14} parent=0 // pred_check_branch
    %27 = sbr.rel (%p25) target = $region29
  $region28: #{run.14} parent=0 // pred_region
    %vm28 = vcmask 261120
    %29 = vst.msk [vmem:[#allocation2] sm:$0xff] %vm28, 0.0
    %30 = vst.msk [vmem:[#allocation2 + $0x8] sm:$0xff] %vm28, 0.0
  $region29: #{run.14} parent=0 // pred_fallthru
    _
  %v31 = vld [vmem:[#allocation2] sm:$0xff]
  %v32 = vld [vmem:[#allocation2 + $0x8] sm:$0xff]
  %v33 = vld [vmem:[%s0] sm:$0xf]
  %v34 = vld [vmem:[%s0 + $0x4] sm:$0xf]
  %v35 = vld [vmem:[%s1] sm:$0xf]
  %v36 = vld [vmem:[%s1 + $0x4] sm:$0xf]
  %v37 = vld [vmem:[%s1 + $0x8] sm:$0xf]
  %v38 = vld [vmem:[%s1 + $0xc] sm:$0xf]
  %v41 = vunpack.c.l.b16 %v33
  %v42 = vunpack.c.l.b16 %v34
  %v43 = vpack.c.b16 %v42, %v41
  %v48 = vunpack.c.l.b16 %v35
  %v49 = vunpack.c.l.b16 %v36
  %v50 = vunpack.c.l.b16 %v37
  %v51 = vunpack.c.l.b16 %v38
  %v52 = vpack.c.b16 %v49, %v48
  %v53 = vpack.c.b16 %v51, %v50
  %vm56 = vcmask 261120
  %v58 = vsel %vm56, %v43, 0
  %60 = vmatprep.subr.bf16.mxu0 0
  %61 = vmatpush1.bf16.msra.mxu0 %v52
  %62 = vmatprep.subr.bf16.mxu0 0
  %63 = vmatpush1.bf16.msra.mxu0 %v53
  %64 = vmatprep.subr.bf16.mxu0 0
  %65 = vmatpush1.bf16.msra.mxu0 0
  %66 = vmatprep.subr.bf16.mxu0 0
  %67 = vmatpush1.bf16.msra.mxu0 0
  %68 = vmatprep.subr.bf16.mxu0 0
  %69 = vmatpush1.bf16.msra.mxu0 0
  %70 = vmatprep.subr.bf16.mxu0 0
  %71 = vmatpush1.bf16.msra.mxu0 0
  %72 = vmatprep.subr.bf16.mxu0 0
  %73 = vmatpush1.bf16.msra.mxu0 0
  %74 = vmatprep.subr.bf16.mxu0 0
  %75 = vmatpush1.bf16.msra.mxu0 0
  %76 = vmatprep.subr.bf16.mxu0 0
  %77 = vmatpush1.bf16.msra.mxu0 0
  %78 = vmatprep.subr.bf16.mxu0 0
  %79 = vmatpush1.bf16.msra.mxu0 0
  %80 = vmatprep.subr.bf16.mxu0 0
  %81 = vmatpush1.bf16.msra.mxu0 0
  %82 = vmatprep.subr.bf16.mxu0 0
  %83 = vmatpush1.bf16.msra.mxu0 0
  %84 = vmatprep.subr.bf16.mxu0 0
  %85 = vmatpush1.bf16.msra.mxu0 0
  %86 = vmatprep.subr.bf16.mxu0 0
  %87 = vmatpush1.bf16.msra.mxu0 0
  %88 = vmatprep.subr.bf16.mxu0 0
  %89 = vmatpush1.bf16.msra.mxu0 0
  %90 = vmatprep.subr.bf16.mxu0 0
  %91 = vmatpush1.bf16.msra.mxu0 0
  %92 = vmatprep.mubr.bf16.mxu0 0
  %93 = vmatmul.mubr.bf16.gmra.mrb[0].mxu0 %v58
  %v94 = vpop.f32.mrb[0].mxu0
  %v95 = vadd.f32 0.0, %v94
  %v96 = vpop.f32.mrb[0].mxu0
  %v97 = vpop.f32.mrb[0].mxu0
  %v98 = vadd.f32 0.0, %v97
  %v99 = vpop.f32.mrb[0].mxu0
  %100 = vdwg.mxu0
  %v101 = vadd.f32 %v31, %v95
  %v102 = vadd.f32 %v32, %v98
  %103 = vst.msk [vmem:[#allocation2] sm:$0xff] %vm56, %v101
  %104 = vst.msk [vmem:[#allocation2 + $0x8] sm:$0xff] %vm56, %v102
  // Predicated region
  $region30: #{run.14} parent=0 // pred_check
    %p105 = pneg %p24
  $region31: #{run.14} parent=0 // pred_check_branch
    %107 = sbr.rel (%p105) target = $region33
  $region32: #{run.14} parent=0 // pred_region
    %v108 = vld [vmem:[#allocation2] sm:$0xff]
    %v109 = vld [vmem:[#allocation2 + $0x8] sm:$0xff]
    %v110 = vld [vmem:[%s2] sm:$0x1]
    %v112 = vlaneseq
    %v113 = vshrl.u32 %v112, 7
    %v114 = vsub.s32 0, %v113
    %v115 = vrot.slane %v110, %v114
    %v117 = vadd.f32 %v108, %v115
    %v118 = vadd.f32 %v109, %v115
    %v119 = vld [vmem:[%s3] sm:$0xf]
    %v120 = vld [vmem:[%s3 + $0x4] sm:$0xf]
    %v121 = vunpack.c.l.bf16 %v119
    %v122 = vunpack.c.l.bf16 %v120
    %v123 = vadd.f32 %v117, %v121
    %v124 = vadd.f32 %v118, %v122
    %v125 = vsel %vm56, %v123, 0.0
    %126 = vadd.xlane.f32.xlu0 %v125
    %v127 = vpop.xlane.xlu0 %126
    %v128 = vsel %vm56, %v124, 0.0
    %129 = vadd.xlane.f32.xlu0 %v128
    %v130 = vpop.xlane.xlu0 %129
    %v131 = vrcp.pop 32.0
    %v132 = vmul.f32 %v127, %v131
    %v133 = vmul.f32 %v130, %v131
    %v134 = vsub.f32 %v123, %v132
    %v135 = vsub.f32 %v124, %v133
    %v136 = vmul.f32 %v134, %v134
    %v137 = vmul.f32 %v135, %v135
    %v138 = vsel %vm56, %v136, 0.0
    %139 = vadd.xlane.f32.xlu0 %v138
    %v140 = vpop.xlane.xlu0 %139
    %v141 = vsel %vm56, %v137, 0.0
    %142 = vadd.xlane.f32.xlu0 %v141
    %v143 = vpop.xlane.xlu0 %142
    %v144 = vmul.f32 %v140, %v131
    %v145 = vmul.f32 %v143, %v131
    %v146 = vadd.f32 %v144, 1e-12
    %v147 = vadd.f32 %v145, 1e-12
    %v148 = vrsqrt.pop %v146
    %v149 = vrsqrt.pop %v147
    %v150 = vmul.f32 %v134, %v148
    %v151 = vmul.f32 %v135, %v149
    %v152 = vld [vmem:[%s4] sm:$0x1]
    %v154 = vlaneseq
    %v155 = vshrl.u32 %v154, 7
    %v156 = vsub.s32 0, %v155
    %v157 = vrot.slane %v152, %v156
    %v159 = vmul.f32 %v150, %v157
    %v160 = vmul.f32 %v151, %v157
    %v161 = vld [vmem:[%s5] sm:$0x1]
    %v163 = vlaneseq
    %v164 = vshrl.u32 %v163, 7
    %v165 = vsub.s32 0, %v164
    %v166 = vrot.slane %v161, %v165
    %v168 = vadd.f32 %v159, %v166
    %v169 = vadd.f32 %v160, %v166
    %v170 = vpack.c.bf16 %v169, %v168
    %v172 = vunpack.c.l.b16 %v170
    %v173 = vunpack.c.h.b16 %v170
    %v174 = vpack.c.b16 %v172, %v172
    %v175 = vpack.c.b16 %v173, %v173
    %vm178 = vcmask 257024
    %179 = vst.msk [vmem:[%s6] sm:$0xf] %vm178, %v174
    %180 = vst.msk [vmem:[%s6 + $0x4] sm:$0xf] %vm178, %v175
  $region33: #{run.14} parent=0 // pred_fallthru
    _
  // Predicated region
  $region34: #{run.14} parent=0 // pred_check
    _
  $region35: #{run.14} parent=0 // pred_check_branch
    %182 = sbr.rel (0) target = $region37
  $region36: #{run.14} parent=0 // pred_region
    _
  $region37: #{run.14} parent=0 // pred_fallthru
    _
  // Predicated region
  $region38: #{run.14} parent=0 // pred_check
    _
  $region39: #{run.14} parent=0 // pred_check_branch
    %184 = sbr.rel (0) target = $region41
  $region40: #{run.14} parent=0 // pred_region
    _
  $region41: #{run.14} parent=0 // pred_fallthru
    _

// kernel: run.21
$region0: #{run.21}
  #allocation0 [shape = 'u32[]', space=smem, size = 0x4, offset = 0x4, fixed_abs, tag = 'smem constant byte address 0x4 - core index']
  #allocation1 [shape = 'u32[144,128]{1,0:T(1,128)}', space=vmem, size = 0x12000, scoped, tag = 'internal scratch']
  #allocation2 [shape = 'f32[16,256]{1,0:T(8,128)}', space=vmem, size = 0x4000, scoped, tag = 'scratch operand']
  %s0 = inlined_call_operand.vmem [shape: bf16[16,32], index: 0, kind: input, shape index: {}]
  %s1 = inlined_call_operand.vmem [shape: bf16[32,256], index: 1, kind: input, shape index: {}]
  %s2 = inlined_call_operand.vmem [shape: f32[1,256], index: 2, kind: input, shape index: {}]
  %s3 = inlined_call_operand.vmem [shape: f32[16,256], index: 3, kind: output, shape index: {}]
  %s4 = sld [smem:[#allocation0]]
  $region30: #{run.21} parent=0
    _
  %s6 = ssub.s32 1, %s4
  %s7 = scalar_select 0, %s6, %s4
  // Predicated region
  $region2: #{run.21} parent=0 // pred_check
    _
  $region3: #{run.21} parent=0 // pred_check_branch
    %9 = sbr.rel (0) target = $region5
  $region4: #{run.21} parent=0 // pred_region
    _
  $region5: #{run.21} parent=0 // pred_fallthru
    _
  // Predicated region
  $region6: #{run.21} parent=0 // pred_check
    _
  $region7: #{run.21} parent=0 // pred_check_branch
    %11 = sbr.rel (0) target = $region9
  $region8: #{run.21} parent=0 // pred_region
    _
  $region9: #{run.21} parent=0 // pred_fallthru
    _
  // Predicated region
  $region10: #{run.21} parent=0 // pred_check
    _
  $region11: #{run.21} parent=0 // pred_check_branch
    %13 = sbr.rel (0) target = $region13
  $region12: #{run.21} parent=0 // pred_region
    _
  $region13: #{run.21} parent=0 // pred_fallthru
    _
  %p15 = scmp.eq.s32.totalorder 0, 0
  // Predicated region
  $region14: #{run.21} parent=0 // pred_check
    %p16 = pneg %p15
  $region15: #{run.21} parent=0 // pred_check_branch
    %18 = sbr.rel (%p16) target = $region17
  $region16: #{run.21} parent=0 // pred_region
    %19 = vst [vmem:[#allocation2] sm:$0xff] 0.0
    %20 = vst [vmem:[#allocation2 + $0x8] sm:$0xff] 0.0
    %21 = vst [vmem:[#allocation2 + $0x10] sm:$0xff] 0.0
    %22 = vst [vmem:[#allocation2 + $0x18] sm:$0xff] 0.0
  $region17: #{run.21} parent=0 // pred_fallthru
    _
  %v23 = vld [vmem:[#allocation2] sm:$0xff]
  %v24 = vld [vmem:[#allocation2 + $0x8] sm:$0xff]
  %v25 = vld [vmem:[#allocation2 + $0x10] sm:$0xff]
  %v26 = vld [vmem:[#allocation2 + $0x18] sm:$0xff]
  %v27 = vld [vmem:[%s0] sm:$0xf]
  %v28 = vld [vmem:[%s0 + $0x4] sm:$0xf]
  %v29 = vld [vmem:[%s1] sm:$0xff]
  %v30 = vld [vmem:[%s1 + $0x8] sm:$0xff]
  %v31 = vld [vmem:[%s1 + $0x10] sm:$0xff]
  %v32 = vld [vmem:[%s1 + $0x18] sm:$0xff]
  %v35 = vunpack.c.l.b16 %v27
  %v36 = vunpack.c.l.b16 %v28
  %v37 = vpack.c.b16 %v36, %v35
  %v42 = vunpack.c.l.b16 %v29
  %v43 = vunpack.c.h.b16 %v29
  %v44 = vunpack.c.l.b16 %v30
  %v45 = vunpack.c.h.b16 %v30
  %v46 = vunpack.c.l.b16 %v31
  %v47 = vunpack.c.h.b16 %v31
  %v48 = vunpack.c.l.b16 %v32
  %v49 = vunpack.c.h.b16 %v32
  %v50 = vpack.c.b16 %v44, %v42
  %v51 = vpack.c.b16 %v45, %v43
  %v52 = vpack.c.b16 %v48, %v46
  %v53 = vpack.c.b16 %v49, %v47
  %vm58 = vcmask 261120
  %v60 = vsel %vm58, %v37, 0
  %62 = vmatprep.subr.bf16.mxu0 %v51
  %63 = vmatpush1.bf16.msra.mxu0 %v50
  %64 = vmatprep.subr.bf16.mxu0 %v53
  %65 = vmatpush1.bf16.msra.mxu0 %v52
  %66 = vmatprep.subr.bf16.mxu0 0
  %67 = vmatpush1.bf16.msra.mxu0 0
  %68 = vmatprep.subr.bf16.mxu0 0
  %69 = vmatpush1.bf16.msra.mxu0 0
  %70 = vmatprep.subr.bf16.mxu0 0
  %71 = vmatpush1.bf16.msra.mxu0 0
  %72 = vmatprep.subr.bf16.mxu0 0
  %73 = vmatpush1.bf16.msra.mxu0 0
  %74 = vmatprep.subr.bf16.mxu0 0
  %75 = vmatpush1.bf16.msra.mxu0 0
  %76 = vmatprep.subr.bf16.mxu0 0
  %77 = vmatpush1.bf16.msra.mxu0 0
  %78 = vmatprep.subr.bf16.mxu0 0
  %79 = vmatpush1.bf16.msra.mxu0 0
  %80 = vmatprep.subr.bf16.mxu0 0
  %81 = vmatpush1.bf16.msra.mxu0 0
  %82 = vmatprep.subr.bf16.mxu0 0
  %83 = vmatpush1.bf16.msra.mxu0 0
  %84 = vmatprep.subr.bf16.mxu0 0
  %85 = vmatpush1.bf16.msra.mxu0 0
  %86 = vmatprep.subr.bf16.mxu0 0
  %87 = vmatpush1.bf16.msra.mxu0 0
  %88 = vmatprep.subr.bf16.mxu0 0
  %89 = vmatpush1.bf16.msra.mxu0 0
  %90 = vmatprep.subr.bf16.mxu0 0
  %91 = vmatpush1.bf16.msra.mxu0 0
  %92 = vmatprep.subr.bf16.mxu0 0
  %93 = vmatpush1.bf16.msra.mxu0 0
  %94 = vmatprep.mubr.bf16.mxu0 0
  %95 = vmatmul.mubr.bf16.gmra.mrb[0].mxu0 %v60
  %v96 = vpop.f32.mrb[0].mxu0
  %v97 = vadd.f32 0.0, %v96
  %v98 = vpop.f32.mrb[0].mxu0
  %v99 = vadd.f32 0.0, %v98
  %v100 = vpop.f32.mrb[0].mxu0
  %v101 = vadd.f32 0.0, %v100
  %v102 = vpop.f32.mrb[0].mxu0
  %v103 = vadd.f32 0.0, %v102
  %104 = vdwg.mxu0
  %v105 = vadd.f32 %v23, %v97
  %v106 = vadd.f32 %v24, %v99
  %v107 = vadd.f32 %v25, %v101
  %v108 = vadd.f32 %v26, %v103
  %109 = vst [vmem:[#allocation2] sm:$0xff] %v105
  %110 = vst [vmem:[#allocation2 + $0x8] sm:$0xff] %v106
  %111 = vst [vmem:[#allocation2 + $0x10] sm:$0xff] %v107
  %112 = vst [vmem:[#allocation2 + $0x18] sm:$0xff] %v108
  // Predicated region
  $region18: #{run.21} parent=0 // pred_check
    %p113 = pneg %p15
  $region19: #{run.21} parent=0 // pred_check_branch
    %115 = sbr.rel (%p113) target = $region21
  $region20: #{run.21} parent=0 // pred_region
    %v116 = vld [vmem:[#allocation2] sm:$0xff]
    %v117 = vld [vmem:[#allocation2 + $0x8] sm:$0xff]
    %v118 = vld [vmem:[#allocation2 + $0x10] sm:$0xff]
    %v119 = vld [vmem:[#allocation2 + $0x18] sm:$0xff]
    %v120 = vld [vmem:[%s2] sm:$0x3]
    %v122 = vlaneseq
    %v123 = vshrl.u32 %v122, 7
    %v124 = vsub.s32 0, %v123
    %v125 = vrot.slane %v120, %v124
    %v126 = vlaneseq
    %v127 = vshrl.u32 %v126, 7
    %v128 = vsub.s32 1, %v127
    %v129 = vrot.slane %v120, %v128
    %v132 = vadd.f32 %v116, %v125
    %v133 = vadd.f32 %v117, %v129
    %v134 = vadd.f32 %v118, %v125
    %v135 = vadd.f32 %v119, %v129
    %136 = vst [vmem:[%s3] sm:$0xff] %v132
    %137 = vst [vmem:[%s3 + $0x8] sm:$0xff] %v133
    %138 = vst [vmem:[%s3 + $0x10] sm:$0xff] %v134
    %139 = vst [vmem:[%s3 + $0x18] sm:$0xff] %v135
  $region21: #{run.21} parent=0 // pred_fallthru
    _
  // Predicated region
  $region22: #{run.21} parent=0 // pred_check
    _
  $region23: #{run.21} parent=0 // pred_check_branch
    %141 = sbr.rel (0) target = $region25
  $region24: #{run.21} parent=0 // pred_region
    _
  $region25: #{run.21} parent=0 // pred_fallthru
    _
  // Predicated region
  $region26: #{run.21} parent=0 // pred_check
    _
  $region27: #{run.21} parent=0 // pred_check_branch
    %143 = sbr.rel (0) target = $region29
  $region28: #{run.21} parent=0 // pred_region
    _
  $region29: #{run.21} parent=0 // pred_fallthru
    _

// kernel: run.20
$region0: #{run.20}
  #allocation0 [shape = 'u32[]', space=smem, size = 0x4, offset = 0x4, fixed_abs, tag = 'smem constant byte address 0x4 - core index']
  #allocation1 [shape = 'u32[144,128]{1,0:T(1,128)}', space=vmem, size = 0x12000, scoped, tag = 'internal scratch']
  #allocation2 [shape = 'f32[16,32]{1,0:T(8,128)}', space=vmem, size = 0x2000, scoped, tag = 'scratch operand']
  %s0 = inlined_call_operand.vmem [shape: bf16[16,32], index: 0, kind: input, shape index: {}]
  %s1 = inlined_call_operand.vmem [shape: bf16[32,32], index: 1, kind: input, shape index: {}]
  %s2 = inlined_call_operand.vmem [shape: f32[1,32], index: 2, kind: input, shape index: {}]
  %s3 = inlined_call_operand.vmem [shape: f32[1,32], index: 3, kind: input, shape index: {}]
  %s4 = inlined_call_operand.vmem [shape: f32[1,32], index: 4, kind: input, shape index: {}]
  %s5 = inlined_call_operand.vmem [shape: bf16[16,32], index: 5, kind: output, shape index: {}]
  %s6 = sld [smem:[#allocation0]]
  $region38: #{run.20} parent=0
    _
  %s8 = ssub.s32 1, %s6
  %s9 = scalar_select 0, %s8, %s6
  // Predicated region
  $region2: #{run.20} parent=0 // pred_check
    _
  $region3: #{run.20} parent=0 // pred_check_branch
    %11 = sbr.rel (0) target = $region5
  $region4: #{run.20} parent=0 // pred_region
    _
  $region5: #{run.20} parent=0 // pred_fallthru
    _
  // Predicated region
  $region6: #{run.20} parent=0 // pred_check
    _
  $region7: #{run.20} parent=0 // pred_check_branch
    %13 = sbr.rel (0) target = $region9
  $region8: #{run.20} parent=0 // pred_region
    _
  $region9: #{run.20} parent=0 // pred_fallthru
    _
  // Predicated region
  $region10: #{run.20} parent=0 // pred_check
    _
  $region11: #{run.20} parent=0 // pred_check_branch
    %15 = sbr.rel (0) target = $region13
  $region12: #{run.20} parent=0 // pred_region
    _
  $region13: #{run.20} parent=0 // pred_fallthru
    _
  // Predicated region
  $region14: #{run.20} parent=0 // pred_check
    _
  $region15: #{run.20} parent=0 // pred_check_branch
    %17 = sbr.rel (0) target = $region17
  $region16: #{run.20} parent=0 // pred_region
    _
  $region17: #{run.20} parent=0 // pred_fallthru
    _
  // Predicated region
  $region18: #{run.20} parent=0 // pred_check
    _
  $region19: #{run.20} parent=0 // pred_check_branch
    %19 = sbr.rel (0) target = $region21
  $region20: #{run.20} parent=0 // pred_region
    _
  $region21: #{run.20} parent=0 // pred_fallthru
    _
  %p21 = scmp.eq.s32.totalorder 0, 0
  // Predicated region
  $region22: #{run.20} parent=0 // pred_check
    %p22 = pneg %p21
  $region23: #{run.20} parent=0 // pred_check_branch
    %24 = sbr.rel (%p22) target = $region25
  $region24: #{run.20} parent=0 // pred_region
    %vm25 = vcmask 261120
    %26 = vst.msk [vmem:[#allocation2] sm:$0xff] %vm25, 0.0
    %27 = vst.msk [vmem:[#allocation2 + $0x8] sm:$0xff] %vm25, 0.0
  $region25: #{run.20} parent=0 // pred_fallthru
    _
  %v28 = vld [vmem:[#allocation2] sm:$0xff]
  %v29 = vld [vmem:[#allocation2 + $0x8] sm:$0xff]
  %v30 = vld [vmem:[%s0] sm:$0xf]
  %v31 = vld [vmem:[%s0 + $0x4] sm:$0xf]
  %v32 = vld [vmem:[%s1] sm:$0xf]
  %v33 = vld [vmem:[%s1 + $0x4] sm:$0xf]
  %v34 = vld [vmem:[%s1 + $0x8] sm:$0xf]
  %v35 = vld [vmem:[%s1 + $0xc] sm:$0xf]
  %v38 = vunpack.c.l.b16 %v30
  %v39 = vunpack.c.l.b16 %v31
  %v40 = vpack.c.b16 %v39, %v38
  %v45 = vunpack.c.l.b16 %v32
  %v46 = vunpack.c.l.b16 %v33
  %v47 = vunpack.c.l.b16 %v34
  %v48 = vunpack.c.l.b16 %v35
  %v49 = vpack.c.b16 %v46, %v45
  %v50 = vpack.c.b16 %v48, %v47
  %vm53 = vcmask 261120
  %v55 = vsel %vm53, %v40, 0
  %57 = vmatprep.subr.bf16.mxu0 0
  %58 = vmatpush1.bf16.msra.mxu0 %v49
  %59 = vmatprep.subr.bf16.mxu0 0
  %60 = vmatpush1.bf16.msra.mxu0 %v50
  %61 = vmatprep.subr.bf16.mxu0 0
  %62 = vmatpush1.bf16.msra.mxu0 0
  %63 = vmatprep.subr.bf16.mxu0 0
  %64 = vmatpush1.bf16.msra.mxu0 0
  %65 = vmatprep.subr.bf16.mxu0 0
  %66 = vmatpush1.bf16.msra.mxu0 0
  %67 = vmatprep.subr.bf16.mxu0 0
  %68 = vmatpush1.bf16.msra.mxu0 0
  %69 = vmatprep.subr.bf16.mxu0 0
  %70 = vmatpush1.bf16.msra.mxu0 0
  %71 = vmatprep.subr.bf16.mxu0 0
  %72 = vmatpush1.bf16.msra.mxu0 0
  %73 = vmatprep.subr.bf16.mxu0 0
  %74 = vmatpush1.bf16.msra.mxu0 0
  %75 = vmatprep.subr.bf16.mxu0 0
  %76 = vmatpush1.bf16.msra.mxu0 0
  %77 = vmatprep.subr.bf16.mxu0 0
  %78 = vmatpush1.bf16.msra.mxu0 0
  %79 = vmatprep.subr.bf16.mxu0 0
  %80 = vmatpush1.bf16.msra.mxu0 0
  %81 = vmatprep.subr.bf16.mxu0 0
  %82 = vmatpush1.bf16.msra.mxu0 0
  %83 = vmatprep.subr.bf16.mxu0 0
  %84 = vmatpush1.bf16.msra.mxu0 0
  %85 = vmatprep.subr.bf16.mxu0 0
  %86 = vmatpush1.bf16.msra.mxu0 0
  %87 = vmatprep.subr.bf16.mxu0 0
  %88 = vmatpush1.bf16.msra.mxu0 0
  %89 = vmatprep.mubr.bf16.mxu0 0
  %90 = vmatmul.mubr.bf16.gmra.mrb[0].mxu0 %v55
  %v91 = vpop.f32.mrb[0].mxu0
  %v92 = vadd.f32 0.0, %v91
  %v93 = vpop.f32.mrb[0].mxu0
  %v94 = vpop.f32.mrb[0].mxu0
  %v95 = vadd.f32 0.0, %v94
  %v96 = vpop.f32.mrb[0].mxu0
  %97 = vdwg.mxu0
  %v98 = vadd.f32 %v28, %v92
  %v99 = vadd.f32 %v29, %v95
  %100 = vst.msk [vmem:[#allocation2] sm:$0xff] %vm53, %v98
  %101 = vst.msk [vmem:[#allocation2 + $0x8] sm:$0xff] %vm53, %v99
  // Predicated region
  $region26: #{run.20} parent=0 // pred_check
    %p102 = pneg %p21
  $region27: #{run.20} parent=0 // pred_check_branch
    %104 = sbr.rel (%p102) target = $region29
  $region28: #{run.20} parent=0 // pred_region
    %v105 = vld [vmem:[#allocation2] sm:$0xff]
    %v106 = vld [vmem:[#allocation2 + $0x8] sm:$0xff]
    %v107 = vld [vmem:[%s2] sm:$0x1]
    %v109 = vlaneseq
    %v110 = vshrl.u32 %v109, 7
    %v111 = vsub.s32 0, %v110
    %v112 = vrot.slane %v107, %v111
    %v114 = vadd.f32 %v105, %v112
    %v115 = vadd.f32 %v106, %v112
    %v116 = vmul.f32 %v114, 0.5
    %v117 = vmul.f32 %v115, 0.5
    %v118 = vmul.f32 %v114, 0.044715
    %v119 = vmul.f32 %v115, 0.044715
    %v120 = vmul.f32 %v118, %v114
    %v121 = vmul.f32 %v119, %v115
    %v122 = vmul.f32 %v120, %v114
    %v123 = vmul.f32 %v121, %v115
    %v124 = vadd.f32 %v114, %v122
    %v125 = vadd.f32 %v115, %v123
    %v126 = vmul.f32 %v124, 0.7978846
    %v127 = vmul.f32 %v125, 0.7978846
    %v128 = vtanh.pop %v126
    %v129 = vtanh.pop %v127
    %v130 = vadd.f32 %v128, 1.0
    %v131 = vadd.f32 %v129, 1.0
    %v132 = vmul.f32 %v116, %v130
    %v133 = vmul.f32 %v117, %v131
    %v134 = vsel %vm53, %v132, 0.0
    %135 = vadd.xlane.f32.xlu0 %v134
    %v136 = vpop.xlane.xlu0 %135
    %v137 = vsel %vm53, %v133, 0.0
    %138 = vadd.xlane.f32.xlu0 %v137
    %v139 = vpop.xlane.xlu0 %138
    %v140 = vrcp.pop 32.0
    %v141 = vmul.f32 %v136, %v140
    %v142 = vmul.f32 %v139, %v140
    %v143 = vsub.f32 %v132, %v141
    %v144 = vsub.f32 %v133, %v142
    %v145 = vmul.f32 %v143, %v143
    %v146 = vmul.f32 %v144, %v144
    %v147 = vsel %vm53, %v145, 0.0
    %148 = vadd.xlane.f32.xlu0 %v147
    %v149 = vpop.xlane.xlu0 %148
    %v150 = vsel %vm53, %v146, 0.0
    %151 = vadd.xlane.f32.xlu0 %v150
    %v152 = vpop.xlane.xlu0 %151
    %v153 = vmul.f32 %v149, %v140
    %v154 = vmul.f32 %v152, %v140
    %v155 = vadd.f32 %v153, 1e-12
    %v156 = vadd.f32 %v154, 1e-12
    %v157 = vrsqrt.pop %v155
    %v158 = vrsqrt.pop %v156
    %v159 = vmul.f32 %v143, %v157
    %v160 = vmul.f32 %v144, %v158
    %v161 = vld [vmem:[%s3] sm:$0x1]
    %v163 = vlaneseq
    %v164 = vshrl.u32 %v163, 7
    %v165 = vsub.s32 0, %v164
    %v166 = vrot.slane %v161, %v165
    %v168 = vmul.f32 %v159, %v166
    %v169 = vmul.f32 %v160, %v166
    %v170 = vld [vmem:[%s4] sm:$0x1]
    %v172 = vlaneseq
    %v173 = vshrl.u32 %v172, 7
    %v174 = vsub.s32 0, %v173
    %v175 = vrot.slane %v170, %v174
    %v177 = vadd.f32 %v168, %v175
    %v178 = vadd.f32 %v169, %v175
    %v179 = vpack.c.bf16 %v178, %v177
    %v181 = vunpack.c.l.b16 %v179
    %v182 = vunpack.c.h.b16 %v179
    %v183 = vpack.c.b16 %v181, %v181
    %v184 = vpack.c.b16 %v182, %v182
    %vm187 = vcmask 257024
    %188 = vst.msk [vmem:[%s5] sm:$0xf] %vm187, %v183
    %189 = vst.msk [vmem:[%s5 + $0x4] sm:$0xf] %vm187, %v184
  $region29: #{run.20} parent=0 // pred_fallthru
    _
  // Predicated region
  $region30: #{run.20} parent=0 // pred_check
    _
  $region31: #{run.20} parent=0 // pred_check_branch
    %191 = sbr.rel (0) target = $region33
  $region32: #{run.20} parent=0 // pred_region
    _
  $region33: #{run.20} parent=0 // pred_fallthru
    _
  // Predicated region
  $region34: #{run.20} parent=0 // pred_check
    _
  $region35: #{run.20} parent=0 // pred_check_branch
    %193 = sbr.rel (0) target = $region37
  $region36: #{run.20} parent=0 // pred_region
    _
  $region37: #{run.20} parent=0 // pred_fallthru
    _

// kernel: run.15
$region0: #{run.15}
  #allocation0 [shape = 'u32[]', space=smem, size = 0x4, offset = 0x4, fixed_abs, tag = 'smem constant byte address 0x4 - core index']
  #allocation1 [shape = 'u32[144,128]{1,0:T(1,128)}', space=vmem, size = 0x12000, scoped, tag = 'internal scratch']
  #allocation2 [shape = 'f32[16,32]{1,0:T(8,128)}', space=vmem, size = 0x2000, scoped, tag = 'scratch operand']
  %s0 = inlined_call_operand.vmem [shape: bf16[16,32], index: 0, kind: input, shape index: {}]
  %s1 = inlined_call_operand.vmem [shape: bf16[32,64], index: 1, kind: input, shape index: {}]
  %s2 = inlined_call_operand.vmem [shape: f32[1,64], index: 2, kind: input, shape index: {}]
  %s3 = inlined_call_operand.vmem [shape: bf16[64,32], index: 3, kind: input, shape index: {}]
  %s4 = inlined_call_operand.vmem [shape: f32[1,32], index: 4, kind: input, shape index: {}]
  %s5 = inlined_call_operand.vmem [shape: f32[1,32], index: 5, kind: input, shape index: {}]
  %s6 = inlined_call_operand.vmem [shape: f32[1,32], index: 6, kind: input, shape index: {}]
  %s7 = inlined_call_operand.vmem [shape: bf16[16,32], index: 7, kind: output, shape index: {}]
  %s8 = sld [smem:[#allocation0]]
  $region46: #{run.15} parent=0
    _
  %s10 = ssub.s32 1, %s8
  %s11 = scalar_select 0, %s10, %s8
  // Predicated region
  $region2: #{run.15} parent=0 // pred_check
    _
  $region3: #{run.15} parent=0 // pred_check_branch
    %13 = sbr.rel (0) target = $region5
  $region4: #{run.15} parent=0 // pred_region
    _
  $region5: #{run.15} parent=0 // pred_fallthru
    _
  // Predicated region
  $region6: #{run.15} parent=0 // pred_check
    _
  $region7: #{run.15} parent=0 // pred_check_branch
    %15 = sbr.rel (0) target = $region9
  $region8: #{run.15} parent=0 // pred_region
    _
  $region9: #{run.15} parent=0 // pred_fallthru
    _
  // Predicated region
  $region10: #{run.15} parent=0 // pred_check
    _
  $region11: #{run.15} parent=0 // pred_check_branch
    %17 = sbr.rel (0) target = $region13
  $region12: #{run.15} parent=0 // pred_region
    _
  $region13: #{run.15} parent=0 // pred_fallthru
    _
  // Predicated region
  $region14: #{run.15} parent=0 // pred_check
    _
  $region15: #{run.15} parent=0 // pred_check_branch
    %19 = sbr.rel (0) target = $region17
  $region16: #{run.15} parent=0 // pred_region
    _
  $region17: #{run.15} parent=0 // pred_fallthru
    _
  // Predicated region
  $region18: #{run.15} parent=0 // pred_check
    _
  $region19: #{run.15} parent=0 // pred_check_branch
    %21 = sbr.rel (0) target = $region21
  $region20: #{run.15} parent=0 // pred_region
    _
  $region21: #{run.15} parent=0 // pred_fallthru
    _
  // Predicated region
  $region22: #{run.15} parent=0 // pred_check
    _
  $region23: #{run.15} parent=0 // pred_check_branch
    %23 = sbr.rel (0) target = $region25
  $region24: #{run.15} parent=0 // pred_region
    _
  $region25: #{run.15} parent=0 // pred_fallthru
    _
  // Predicated region
  $region26: #{run.15} parent=0 // pred_check
    _
  $region27: #{run.15} parent=0 // pred_check_branch
    %25 = sbr.rel (0) target = $region29
  $region28: #{run.15} parent=0 // pred_region
    _
  $region29: #{run.15} parent=0 // pred_fallthru
    _
  %p27 = scmp.eq.s32.totalorder 0, 0
  // Predicated region
  $region30: #{run.15} parent=0 // pred_check
    %p28 = pneg %p27
  $region31: #{run.15} parent=0 // pred_check_branch
    %30 = sbr.rel (%p28) target = $region33
  $region32: #{run.15} parent=0 // pred_region
    %vm31 = vcmask 261120
    %32 = vst.msk [vmem:[#allocation2] sm:$0xff] %vm31, 0.0
    %33 = vst.msk [vmem:[#allocation2 + $0x8] sm:$0xff] %vm31, 0.0
  $region33: #{run.15} parent=0 // pred_fallthru
    _
  %v34 = vld [vmem:[%s0] sm:$0xf]
  %v35 = vld [vmem:[%s0 + $0x4] sm:$0xf]
  %v36 = vld [vmem:[%s1] sm:$0xf]
  %v37 = vld [vmem:[%s1 + $0x4] sm:$0xf]
  %v38 = vld [vmem:[%s1 + $0x8] sm:$0xf]
  %v39 = vld [vmem:[%s1 + $0xc] sm:$0xf]
  %v40 = vld [vmem:[%s2] sm:$0x1]
  %v42 = vlaneseq
  %v43 = vshrl.u32 %v42, 7
  %v44 = vsub.s32 0, %v43
  %v45 = vrot.slane %v40, %v44
  %v49 = vunpack.c.l.b16 %v34
  %v50 = vunpack.c.l.b16 %v35
  %v51 = vpack.c.b16 %v50, %v49
  %v56 = vunpack.c.l.b16 %v36
  %v57 = vunpack.c.l.b16 %v37
  %v58 = vunpack.c.l.b16 %v38
  %v59 = vunpack.c.l.b16 %v39
  %v60 = vpack.c.b16 %v57, %v56
  %v61 = vpack.c.b16 %v59, %v58
  %vm64 = vcmask 261120
  %v66 = vsel %vm64, %v51, 0
  %68 = vmatprep.subr.bf16.mxu0 0
  %69 = vmatpush1.bf16.msra.mxu0 %v60
  %70 = vmatprep.subr.bf16.mxu0 0
  %71 = vmatpush1.bf16.msra.mxu0 %v61
  %72 = vmatprep.subr.bf16.mxu0 0
  %73 = vmatpush1.bf16.msra.mxu0 0
  %74 = vmatprep.subr.bf16.mxu0 0
  %75 = vmatpush1.bf16.msra.mxu0 0
  %76 = vmatprep.subr.bf16.mxu0 0
  %77 = vmatpush1.bf16.msra.mxu0 0
  %78 = vmatprep.subr.bf16.mxu0 0
  %79 = vmatpush1.bf16.msra.mxu0 0
  %80 = vmatprep.subr.bf16.mxu0 0
  %81 = vmatpush1.bf16.msra.mxu0 0
  %82 = vmatprep.subr.bf16.mxu0 0
  %83 = vmatpush1.bf16.msra.mxu0 0
  %84 = vmatprep.subr.bf16.mxu0 0
  %85 = vmatpush1.bf16.msra.mxu0 0
  %86 = vmatprep.subr.bf16.mxu0 0
  %87 = vmatpush1.bf16.msra.mxu0 0
  %88 = vmatprep.subr.bf16.mxu0 0
  %89 = vmatpush1.bf16.msra.mxu0 0
  %90 = vmatprep.subr.bf16.mxu0 0
  %91 = vmatpush1.bf16.msra.mxu0 0
  %92 = vmatprep.subr.bf16.mxu0 0
  %93 = vmatpush1.bf16.msra.mxu0 0
  %94 = vmatprep.subr.bf16.mxu0 0
  %95 = vmatpush1.bf16.msra.mxu0 0
  %96 = vmatprep.subr.bf16.mxu0 0
  %97 = vmatpush1.bf16.msra.mxu0 0
  %98 = vmatprep.subr.bf16.mxu0 0
  %99 = vmatpush1.bf16.msra.mxu0 0
  %100 = vmatprep.mubr.bf16.mxu0 0
  %101 = vmatmul.mubr.bf16.gmra.mrb[0].mxu0 %v66
  %v102 = vpop.f32.mrb[0].mxu0
  %v103 = vadd.f32 %v45, %v102
  %v104 = vpop.f32.mrb[0].mxu0
  %v105 = vpop.f32.mrb[0].mxu0
  %v106 = vadd.f32 %v45, %v105
  %v107 = vpop.f32.mrb[0].mxu0
  %108 = vdwg.mxu0
  %v109 = vmul.f32 %v103, 0.5
  %v110 = vmul.f32 %v106, 0.5
  %v111 = vmul.f32 %v103, 0.044715
  %v112 = vmul.f32 %v106, 0.044715
  %v113 = vmul.f32 %v111, %v103
  %v114 = vmul.f32 %v112, %v106
  %v115 = vmul.f32 %v113, %v103
  %v116 = vmul.f32 %v114, %v106
  %v117 = vadd.f32 %v103, %v115
  %v118 = vadd.f32 %v106, %v116
  %v119 = vmul.f32 %v117, 0.7978846
  %v120 = vmul.f32 %v118, 0.7978846
  %v121 = vtanh.pop %v119
  %v122 = vtanh.pop %v120
  %v123 = vadd.f32 %v121, 1.0
  %v124 = vadd.f32 %v122, 1.0
  %v125 = vmul.f32 %v109, %v123
  %v126 = vmul.f32 %v110, %v124
  %v127 = vld [vmem:[#allocation2] sm:$0xff]
  %v128 = vld [vmem:[#allocation2 + $0x8] sm:$0xff]
  %v129 = vpack.c.bf16 %v126, %v125
  %v130 = vld [vmem:[%s3] sm:$0xf]
  %v131 = vld [vmem:[%s3 + $0x4] sm:$0xf]
  %v132 = vld [vmem:[%s3 + $0x8] sm:$0xf]
  %v133 = vld [vmem:[%s3 + $0xc] sm:$0xf]
  %v134 = vld [vmem:[%s3 + $0x10] sm:$0xf]
  %v135 = vld [vmem:[%s3 + $0x14] sm:$0xf]
  %v136 = vld [vmem:[%s3 + $0x18] sm:$0xf]
  %v137 = vld [vmem:[%s3 + $0x1c] sm:$0xf]
  %v146 = vunpack.c.l.b16 %v130
  %v147 = vunpack.c.l.b16 %v131
  %v148 = vunpack.c.l.b16 %v132
  %v149 = vunpack.c.l.b16 %v133
  %v150 = vunpack.c.l.b16 %v134
  %v151 = vunpack.c.l.b16 %v135
  %v152 = vunpack.c.l.b16 %v136
  %v153 = vunpack.c.l.b16 %v137
  %v154 = vpack.c.b16 %v147, %v146
  %v155 = vpack.c.b16 %v149, %v148
  %v156 = vpack.c.b16 %v151, %v150
  %v157 = vpack.c.b16 %v153, %v152
  %vm162 = vcmask 523264
  %v164 = vsel %vm162, %v129, 0
  %166 = vmatprep.subr.bf16.mxu0 0
  %167 = vmatpush1.bf16.msra.mxu0 %v154
  %168 = vmatprep.subr.bf16.mxu0 0
  %169 = vmatpush1.bf16.msra.mxu0 %v155
  %170 = vmatprep.subr.bf16.mxu0 0
  %171 = vmatpush1.bf16.msra.mxu0 %v156
  %172 = vmatprep.subr.bf16.mxu0 0
  %173 = vmatpush1.bf16.msra.mxu0 %v157
  %174 = vmatprep.subr.bf16.mxu0 0
  %175 = vmatpush1.bf16.msra.mxu0 0
  %176 = vmatprep.subr.bf16.mxu0 0
  %177 = vmatpush1.bf16.msra.mxu0 0
  %178 = vmatprep.subr.bf16.mxu0 0
  %179 = vmatpush1.bf16.msra.mxu0 0
  %180 = vmatprep.subr.bf16.mxu0 0
  %181 = vmatpush1.bf16.msra.mxu0 0
  %182 = vmatprep.subr.bf16.mxu0 0
  %183 = vmatpush1.bf16.msra.mxu0 0
  %184 = vmatprep.subr.bf16.mxu0 0
  %185 = vmatpush1.bf16.msra.mxu0 0
  %186 = vmatprep.subr.bf16.mxu0 0
  %187 = vmatpush1.bf16.msra.mxu0 0
  %188 = vmatprep.subr.bf16.mxu0 0
  %189 = vmatpush1.bf16.msra.mxu0 0
  %190 = vmatprep.subr.bf16.mxu0 0
  %191 = vmatpush1.bf16.msra.mxu0 0
  %192 = vmatprep.subr.bf16.mxu0 0
  %193 = vmatpush1.bf16.msra.mxu0 0
  %194 = vmatprep.subr.bf16.mxu0 0
  %195 = vmatpush1.bf16.msra.mxu0 0
  %196 = vmatprep.subr.bf16.mxu0 0
  %197 = vmatpush1.bf16.msra.mxu0 0
  %198 = vmatprep.mubr.bf16.mxu0 0
  %199 = vmatmul.mubr.bf16.gmra.mrb[0].mxu0 %v164
  %v200 = vpop.f32.mrb[0].mxu0
  %v201 = vadd.f32 0.0, %v200
  %v202 = vpop.f32.mrb[0].mxu0
  %v203 = vpop.f32.mrb[0].mxu0
  %v204 = vadd.f32 0.0, %v203
  %v205 = vpop.f32.mrb[0].mxu0
  %206 = vdwg.mxu0
  %v207 = vadd.f32 %v127, %v201
  %v208 = vadd.f32 %v128, %v204
  %209 = vst.msk [vmem:[#allocation2] sm:$0xff] %vm64, %v207
  %210 = vst.msk [vmem:[#allocation2 + $0x8] sm:$0xff] %vm64, %v208
  // Predicated region
  $region34: #{run.15} parent=0 // pred_check
    %p211 = pneg %p27
  $region35: #{run.15} parent=0 // pred_check_branch
    %213 = sbr.rel (%p211) target = $region37
  $region36: #{run.15} parent=0 // pred_region
    %v214 = vld [vmem:[#allocation2] sm:$0xff]
    %v215 = vld [vmem:[#allocation2 + $0x8] sm:$0xff]
    %v216 = vld [vmem:[%s4] sm:$0x1]
    %v218 = vlaneseq
    %v219 = vshrl.u32 %v218, 7
    %v220 = vsub.s32 0, %v219
    %v221 = vrot.slane %v216, %v220
    %v223 = vadd.f32 %v214, %v221
    %v224 = vadd.f32 %v215, %v221
    %v225 = vld [vmem:[%s0] sm:$0xf]
    %v226 = vld [vmem:[%s0 + $0x4] sm:$0xf]
    %v227 = vunpack.c.l.bf16 %v225
    %v228 = vunpack.c.l.bf16 %v226
    %v229 = vadd.f32 %v223, %v227
    %v230 = vadd.f32 %v224, %v228
    %v231 = vsel %vm64, %v229, 0.0
    %232 = vadd.xlane.f32.xlu0 %v231
    %v233 = vpop.xlane.xlu0 %232
    %v234 = vsel %vm64, %v230, 0.0
    %235 = vadd.xlane.f32.xlu0 %v234
    %v236 = vpop.xlane.xlu0 %235
    %v237 = vrcp.pop 32.0
    %v238 = vmul.f32 %v233, %v237
    %v239 = vmul.f32 %v236, %v237
    %v240 = vsub.f32 %v229, %v238
    %v241 = vsub.f32 %v230, %v239
    %v242 = vmul.f32 %v240, %v240
    %v243 = vmul.f32 %v241, %v241
    %v244 = vsel %vm64, %v242, 0.0
    %245 = vadd.xlane.f32.xlu0 %v244
    %v246 = vpop.xlane.xlu0 %245
    %v247 = vsel %vm64, %v243, 0.0
    %248 = vadd.xlane.f32.xlu0 %v247
    %v249 = vpop.xlane.xlu0 %248
    %v250 = vmul.f32 %v246, %v237
    %v251 = vmul.f32 %v249, %v237
    %v252 = vadd.f32 %v250, 1e-12
    %v253 = vadd.f32 %v251, 1e-12
    %v254 = vrsqrt.pop %v252
    %v255 = vrsqrt.pop %v253
    %v256 = vmul.f32 %v240, %v254
    %v257 = vmul.f32 %v241, %v255
    %v258 = vld [vmem:[%s5] sm:$0x1]
    %v260 = vlaneseq
    %v261 = vshrl.u32 %v260, 7
    %v262 = vsub.s32 0, %v261
    %v263 = vrot.slane %v258, %v262
    %v265 = vmul.f32 %v256, %v263
    %v266 = vmul.f32 %v257, %v263
    %v267 = vld [vmem:[%s6] sm:$0x1]
    %v269 = vlaneseq
    %v270 = vshrl.u32 %v269, 7
    %v271 = vsub.s32 0, %v270
    %v272 = vrot.slane %v267, %v271
    %v274 = vadd.f32 %v265, %v272
    %v275 = vadd.f32 %v266, %v272
    %v276 = vpack.c.bf16 %v275, %v274
    %v278 = vunpack.c.l.b16 %v276
    %v279 = vunpack.c.h.b16 %v276
    %v280 = vpack.c.b16 %v278, %v278
    %v281 = vpack.c.b16 %v279, %v279
    %vm284 = vcmask 257024
    %285 = vst.msk [vmem:[%s7] sm:$0xf] %vm284, %v280
    %286 = vst.msk [vmem:[%s7 + $0x4] sm:$0xf] %vm284, %v281
  $region37: #{run.15} parent=0 // pred_fallthru
    _
  // Predicated region
  $region38: #{run.15} parent=0 // pred_check
    _
  $region39: #{run.15} parent=0 // pred_check_branch
    %288 = sbr.rel (0) target = $region41
  $region40: #{run.15} parent=0 // pred_region
    _
  $region41: #{run.15} parent=0 // pred_fallthru
    _
  // Predicated region
  $region42: #{run.15} parent=0 // pred_check
    _
  $region43: #{run.15} parent=0 // pred_check_branch
    %290 = sbr.rel (0) target = $region45
  $region44: #{run.15} parent=0 // pred_region
    _
  $region45: #{run.15} parent=0 // pred_fallthru
    _

</llo_original>
